<compile_context>
chip_gen: v7x
topology: tpu7x:2x2x1
jax: 0.10.0
libtpu: 0.0.40
codegen_flags: <defaults>
</compile_context>

<pallas_src>
import functools

import jax
import jax.numpy as jnp
from jax.experimental import pallas as pl
from jax.experimental.pallas import tpu as pltpu


def _fused_layers_kernel(x_in_ref, wqkv_ref, wom_ref, vec_ref,
                         hid_ref, aw_ref, x_scr,
                         *, num_heads, head_dim):
    """One (batch b, layer l) grid step. Activation carried in x_scr across layers."""
    L, E = x_in_ref.shape
    H, Dh = num_heads, head_dim
    layer = pl.program_id(1)

    # Load the (cls ++ x) input into the VMEM-resident activation at the first layer.
    @pl.when(layer == 0)
    def _():
        x_scr[...] = x_in_ref[...].astype(jnp.float32)

    x = x_scr[...]                                                    # (L, E) f32

    vecs = vec_ref[...]                                               # (4, 3E) packed vectors
    b_qkv = vecs[0]                                                   # (3E,)
    b_om = vecs[1, :E]                                                # fused out_proj+MLP bias
    gamma = vecs[2, :E]
    beta = vecs[3, :E]

    # Fused QKV projection (softmax 1/sqrt(Dh) already folded into the Q columns).
    qkv = jnp.dot(x, wqkv_ref[...],
                  preferred_element_type=jnp.float32) + b_qkv         # (L, 3E)
    q = qkv[:, :E]
    k = qkv[:, E:2 * E]
    v = qkv[:, 2 * E:]

    qh = q.reshape(L, H, Dh).transpose(1, 0, 2)                       # (H, L, Dh)
    kh = k.reshape(L, H, Dh).transpose(1, 0, 2)
    vh = v.reshape(L, H, Dh).transpose(1, 0, 2)

    s = jnp.einsum('hld,hmd->hlm', qh, kh,
                   preferred_element_type=jnp.float32)                # (H, L, L)
    s = s - jnp.max(s, axis=-1, keepdims=True)
    p = jnp.exp(s)
    # exact divide (attn weights are checked / consumed downstream; approx rcp not worth risk)
    p = p / jnp.sum(p, axis=-1, keepdims=True)
    aw_ref[...] = p.astype(aw_ref.dtype)

    ctx = jnp.einsum('hlm,hmd->hld', p, vh,
                     preferred_element_type=jnp.float32)              # (H, L, Dh)
    ctx = ctx.transpose(1, 0, 2).reshape(L, E)                        # (L, E)

    # out_proj and the MLP 'linear' fused into a single matmul (dropout = identity in eval).
    y = jnp.dot(ctx, wom_ref[...],
                preferred_element_type=jnp.float32) + b_om            # (L, E)

    h = x + y                                                         # residual
    mu = jnp.mean(h, axis=-1, keepdims=True)
    var = jnp.mean((h - mu) ** 2, axis=-1, keepdims=True)
    x_new = (h - mu) * jax.lax.rsqrt(var + 1e-5) * gamma + beta       # LayerNorm

    x_scr[...] = x_new                                                # carry to next layer
    hid_ref[...] = x_new.astype(hid_ref.dtype)


def _pack_params(layers_params, num_heads):
    """Fold / stack per-layer params into three stacked arrays for the fused kernel."""
    E = layers_params[0][0].shape[0]
    Dh = E // num_heads
    scale = 1.0 / (Dh ** 0.5)
    wqkv_list, wom_list, vec_list = [], [], []
    pad = jnp.zeros((2 * E,), jnp.float32)
    for (wq_t, wk_t, wv_t, bq, bk, bv, wo_t, bo, wm_t, bm, gamma, beta) in layers_params:
        wqkv = jnp.concatenate([wq_t * scale, wk_t, wv_t], axis=1)           # (E, 3E)
        b_qkv = jnp.concatenate([bq[0] * scale, bk[0], bv[0]], axis=0)       # (3E,)
        wom = wo_t @ wm_t                                                    # (E, E)
        b_om = bo[0] @ wm_t + bm[0]                                          # (E,)
        vecs = jnp.stack([b_qkv,
                          jnp.concatenate([b_om, pad]),
                          jnp.concatenate([gamma[0], pad]),
                          jnp.concatenate([beta[0], pad])], axis=0)          # (4, 3E)
        wqkv_list.append(wqkv)
        wom_list.append(wom)
        vec_list.append(vecs)
    return (jnp.stack(wqkv_list), jnp.stack(wom_list), jnp.stack(vec_list))


def attention_aggregator_forward(x, cls_token, layers_params, num_heads):
    """Mirrors AttentionAggregator.forward (add_mlp=True, add_ln=True, residual=True)."""
    B, S, E = x.shape
    L = S + 1
    NL = len(layers_params)
    H = num_heads
    Dh = E // H

    xin = jnp.concatenate([jnp.broadcast_to(cls_token, (B, 1, E)), x], axis=1)  # (B, L, E)
    wqkv, wom, vecs = _pack_params(layers_params, num_heads)

    kernel = functools.partial(_fused_layers_kernel, num_heads=H, head_dim=Dh)
    hid, aw = pl.pallas_call(
        kernel,
        grid=(B, NL),
        in_specs=[
            pl.BlockSpec((None, L, E), lambda b, l: (b, 0, 0)),        # x (cls ++ input)
            pl.BlockSpec((None, E, 3 * E), lambda b, l: (l, 0, 0)),    # fused QKV weight
            pl.BlockSpec((None, E, E), lambda b, l: (l, 0, 0)),        # fused out_proj@MLP
            pl.BlockSpec((None, 4, 3 * E), lambda b, l: (l, 0, 0)),    # packed bias/LN vectors
        ],
        out_specs=[
            pl.BlockSpec((None, None, L, E), lambda b, l: (l, b, 0, 0)),
            pl.BlockSpec((None, None, H, L, L), lambda b, l: (l, b, 0, 0, 0)),
        ],
        out_shape=(jax.ShapeDtypeStruct((NL, B, L, E), jnp.float32),
                   jax.ShapeDtypeStruct((NL, B, H, L, L), jnp.float32)),
        scratch_shapes=[pltpu.VMEM((L, E), jnp.float32)],              # resident activation
        compiler_params=pltpu.CompilerParams(
            dimension_semantics=("parallel", "arbitrary")),            # B parallel, layers seq
    )(xin, wqkv, wom, vecs)

    hidden_layers = [hid[i] for i in range(NL)]
    attn_weights_list = [aw[i] for i in range(NL)]
    return {'output': hidden_layers[-1][:, :1, :],
            'hidden_layers': hidden_layers,
            'attn_weights': attn_weights_list}


# ---------------- pure-JAX reference (for correctness check) ----------------
def _ref_forward(x, cls_token, layers_params, num_heads):
    B = x.shape[0]
    E = x.shape[-1]
    x = jnp.concatenate([jnp.broadcast_to(cls_token, (B, 1, E)), x], axis=1)
    hiddens, attns = [], []
    for p in layers_params:
        wq_t, wk_t, wv_t, bq, bk, bv, wo_t, bo, wm_t, bm, g, beta = p
        q = x @ wq_t + bq[0]
        k = x @ wk_t + bk[0]
        v = x @ wv_t + bv[0]
        Bn, L, _ = q.shape
        Dh = E // num_heads
        qh = q.reshape(Bn, L, num_heads, Dh).transpose(0, 2, 1, 3)
        kh = k.reshape(Bn, L, num_heads, Dh).transpose(0, 2, 1, 3)
        vh = v.reshape(Bn, L, num_heads, Dh).transpose(0, 2, 1, 3)
        scores = jnp.einsum('bhld,bhmd->bhlm', qh, kh) / (Dh ** 0.5)
        p_attn = jax.nn.softmax(scores, axis=-1)
        ctx = jnp.einsum('bhlm,bhmd->bhld', p_attn, vh)
        ctx = ctx.transpose(0, 2, 1, 3).reshape(Bn, L, E)
        attn_out = ctx @ wo_t + bo[0]
        mlp_out = attn_out @ wm_t + bm[0]
        h = x + mlp_out
        mu = jnp.mean(h, axis=-1, keepdims=True)
        var = jnp.mean((h - mu) ** 2, axis=-1, keepdims=True)
        x = (h - mu) * jax.lax.rsqrt(var + 1e-5) * g[0] + beta[0]
        hiddens.append(x)
        attns.append(p_attn)
    return {'output': x[:, :1, :], 'hidden_layers': hiddens, 'attn_weights': attns}


def _init_params(key, embed_dim, num_layers):
    """Deterministic synthetic parameters matching nn.MultiheadAttention / MLP / LN shapes."""
    E = embed_dim
    layers = []
    cls_key, key = jax.random.split(key)
    cls_token = jax.random.normal(cls_key, (1, 1, E), dtype=jnp.float32)
    for _ in range(num_layers):
        keys = jax.random.split(key, 7)
        key = keys[0]
        in_proj_w = 0.05 * jax.random.normal(keys[1], (3 * E, E), jnp.float32)   # (3E, E)
        in_proj_b = 0.05 * jax.random.normal(keys[2], (3 * E,), jnp.float32)
        out_proj_w = 0.05 * jax.random.normal(keys[3], (E, E), jnp.float32)
        out_proj_b = 0.05 * jax.random.normal(keys[4], (E,), jnp.float32)
        mlp_w = 0.05 * jax.random.normal(keys[5], (E, E), jnp.float32)
        mlp_b = 0.05 * jax.random.normal(keys[6], (E,), jnp.float32)
        wq, wk, wv = in_proj_w[:E], in_proj_w[E:2 * E], in_proj_w[2 * E:]
        bq, bk, bv = in_proj_b[:E], in_proj_b[E:2 * E], in_proj_b[2 * E:]
        gamma = jnp.ones((E,), jnp.float32)
        beta = jnp.zeros((E,), jnp.float32)
        layers.append((
            wq.T, wk.T, wv.T,                       # pre-transposed projection weights
            bq.reshape(1, E), bk.reshape(1, E), bv.reshape(1, E),
            out_proj_w.T, out_proj_b.reshape(1, E),
            mlp_w.T, mlp_b.reshape(1, E),
            gamma.reshape(1, E), beta.reshape(1, E),
        ))
    return cls_token, layers


if __name__ == "__main__":
    B, S, E, H, NUM_LAYERS = 2, 8, 32, 4, 2   # small shapes: seq=8, hidden=32, 4 heads

    key = jax.random.PRNGKey(0)
    pkey, xkey = jax.random.split(key)
    cls_token, layers_params = _init_params(pkey, E, NUM_LAYERS)
    x = jax.random.normal(xkey, (B, S, E), dtype=jnp.float32)

    # TODO(synk): dropout (p=0.1) is implemented as identity (eval mode); train-mode RNG
    # masking is not reproduced here.
    out = attention_aggregator_forward(x, cls_token, layers_params, H)
    jax.block_until_ready(out['output'])
    for h in out['hidden_layers']:
        jax.block_until_ready(h)
    for a in out['attn_weights']:
        jax.block_until_ready(a)

    # sanity check vs pure-JAX reference (unfolded weights -> also validates the algebraic folds)
    ref = _ref_forward(x, cls_token, layers_params, H)
    assert out['output'].shape == (B, 1, E)
    assert out['attn_weights'][0].shape == (B, H, S + 1, S + 1)
    assert jnp.allclose(out['output'], ref['output'], atol=1e-3, rtol=1e-3)
    for a, b in zip(out['hidden_layers'], ref['hidden_layers']):
        assert jnp.allclose(a, b, atol=1e-3, rtol=1e-3)
    for a, b in zip(out['attn_weights'], ref['attn_weights']):
        assert jnp.allclose(a, b, atol=1e-3, rtol=1e-3)

    print("KERNEL_OK")
</pallas_src>

<mosaic_0001>
module attributes {stable_mosaic.version = 11 : i64} {
  func.func @_fused_layers_kernel(%arg0: i32, %arg1: i32, %arg2: memref<1x9x32xf32, #tpu.memory_space<vmem>>, %arg3: memref<1x32x96xf32, #tpu.memory_space<vmem>>, %arg4: memref<1x32x32xf32, #tpu.memory_space<vmem>>, %arg5: memref<1x4x96xf32, #tpu.memory_space<vmem>>, %arg6: memref<1x1x9x32xf32, #tpu.memory_space<vmem>>, %arg7: memref<1x1x4x9x9xf32, #tpu.memory_space<vmem>>, %arg8: memref<9x32xf32, #tpu.memory_space<vmem>>) attributes {dimension_semantics = [#tpu.dimension_semantics<parallel>, #tpu.dimension_semantics<arbitrary>], iteration_bounds = array<i64: 2, 2>, scalar_prefetch = 0 : i64, scratch_operands = 1 : i64, tpu.core_type = #tpu.core_type<tc>, window_params = [{transform_indices = @transform_0, window_bounds = array<i64: 1, 9, 32>}, {transform_indices = @transform_1, window_bounds = array<i64: 1, 32, 96>}, {transform_indices = @transform_2, window_bounds = array<i64: 1, 32, 32>}, {transform_indices = @transform_3, window_bounds = array<i64: 1, 4, 96>}, {transform_indices = @transform_4, window_bounds = array<i64: 1, 1, 9, 32>}, {transform_indices = @transform_5, window_bounds = array<i64: 1, 1, 4, 9, 9>}]} {
    %c0_i32 = arith.constant 0 : i32
    %0 = arith.cmpi eq, %arg1, %c0_i32 : i32
    %1 = arith.extui %0 : i1 to i32
    %c0_i32_0 = arith.constant 0 : i32
    %2 = arith.cmpi ne, %1, %c0_i32_0 : i32
    scf.if %2 {
      %c0_32 = arith.constant 0 : index
      %c0_33 = arith.constant 0 : index
      %c0_34 = arith.constant 0 : index
      %80 = vector.load %arg2[%c0_32, %c0_33, %c0_34] : memref<1x9x32xf32, #tpu.memory_space<vmem>>, vector<1x9x32xf32>
      %81 = vector.shape_cast %80 : vector<1x9x32xf32> to vector<9x32xf32>
      %c0_35 = arith.constant 0 : index
      %c0_36 = arith.constant 0 : index
      %82 = vector.load %arg8[%c0_35, %c0_36] : memref<9x32xf32, #tpu.memory_space<vmem>>, vector<9x32xf32>
      tpu.vector_store %arg8[%c0_35, %c0_36], %81 {strides = array<i32>} : memref<9x32xf32, #tpu.memory_space<vmem>>, vector<9x32xf32>,
    } else {
    }
    %c0 = arith.constant 0 : index
    %c0_1 = arith.constant 0 : index
    %3 = vector.load %arg8[%c0, %c0_1] : memref<9x32xf32, #tpu.memory_space<vmem>>, vector<9x32xf32>
    %c0_2 = arith.constant 0 : index
    %c0_3 = arith.constant 0 : index
    %c0_4 = arith.constant 0 : index
    %4 = vector.load %arg5[%c0_2, %c0_3, %c0_4] : memref<1x4x96xf32, #tpu.memory_space<vmem>>, vector<1x4x96xf32>
    %5 = vector.shape_cast %4 : vector<1x4x96xf32> to vector<4x96xf32>
    %6 = vector.extract_strided_slice %5 {offsets = [0, 0], sizes = [1, 96], strides = [1, 1]} : vector<4x96xf32> to vector<1x96xf32>
    %7 = vector.shape_cast %6 : vector<1x96xf32> to vector<96xf32>
    %8 = vector.extract_strided_slice %5 {offsets = [1, 0], sizes = [1, 32], strides = [1, 1]} : vector<4x96xf32> to vector<1x32xf32>
    %9 = vector.shape_cast %8 : vector<1x32xf32> to vector<32xf32>
    %10 = vector.extract_strided_slice %5 {offsets = [2, 0], sizes = [1, 32], strides = [1, 1]} : vector<4x96xf32> to vector<1x32xf32>
    %11 = vector.shape_cast %10 : vector<1x32xf32> to vector<32xf32>
    %12 = vector.extract_strided_slice %5 {offsets = [3, 0], sizes = [1, 32], strides = [1, 1]} : vector<4x96xf32> to vector<1x32xf32>
    %13 = vector.shape_cast %12 : vector<1x32xf32> to vector<32xf32>
    %c0_5 = arith.constant 0 : index
    %c0_6 = arith.constant 0 : index
    %c0_7 = arith.constant 0 : index
    %14 = vector.load %arg3[%c0_5, %c0_6, %c0_7] : memref<1x32x96xf32, #tpu.memory_space<vmem>>, vector<1x32x96xf32>
    %15 = vector.shape_cast %14 : vector<1x32x96xf32> to vector<32x96xf32>
    %cst = arith.constant dense<0.000000e+00> : vector<9x96xf32>
    %16 = tpu.matmul %3, %15, %cst {dimension_numbers = #tpu.dot_dimension_numbers<[1], [0], [0], [1], [0, 0, 1, 1], [], []>} : vector<9x32xf32>, vector<32x96xf32>, vector<9x96xf32> -> vector<9x96xf32>
    %17 = vector.shape_cast %7 : vector<96xf32> to vector<1x96xf32>
    %18 = vector.broadcast %17 : vector<1x96xf32> to vector<9x96xf32>
    %19 = arith.addf %16, %18 : vector<9x96xf32>
    %20 = vector.extract_strided_slice %19 {offsets = [0, 0], sizes = [9, 32], strides = [1, 1]} : vector<9x96xf32> to vector<9x32xf32>
    %21 = vector.extract_strided_slice %19 {offsets = [0, 32], sizes = [9, 32], strides = [1, 1]} : vector<9x96xf32> to vector<9x32xf32>
    %22 = vector.extract_strided_slice %19 {offsets = [0, 64], sizes = [9, 32], strides = [1, 1]} : vector<9x96xf32> to vector<9x32xf32>
    %23 = vector.shape_cast %20 : vector<9x32xf32> to vector<9x4x8xf32>
    %24 = tpu.transpose %23, [1, 0, 2] : vector<9x4x8xf32> -> vector<4x9x8xf32>
    %25 = vector.shape_cast %21 : vector<9x32xf32> to vector<9x4x8xf32>
    %26 = tpu.transpose %25, [1, 0, 2] : vector<9x4x8xf32> -> vector<4x9x8xf32>
    %27 = vector.shape_cast %22 : vector<9x32xf32> to vector<9x4x8xf32>
    %28 = tpu.transpose %27, [1, 0, 2] : vector<9x4x8xf32> -> vector<4x9x8xf32>
    "tpu.trace_start"() <{level = 10 : i32, message = "hld,hmd->hlm"}> : () -> ()
    %cst_8 = arith.constant dense<0.000000e+00> : vector<4x9x9xf32>
    %29 = tpu.matmul %24, %26, %cst_8 {dimension_numbers = #tpu.dot_dimension_numbers<[2], [2], [1], [1], [0, 0, 0, 1, 1, 1], [0], [0]>} : vector<4x9x8xf32>, vector<4x9x8xf32>, vector<4x9x9xf32> -> vector<4x9x9xf32>
    "tpu.trace_stop"() : () -> ()
    %cst_9 = arith.constant dense<0xFF800000> : vector<4x9xf32>
    %30 = vector.multi_reduction <maximumf>, %29, %cst_9 [2] : vector<4x9x9xf32> to vector<4x9xf32>
    %31 = vector.shape_cast %30 : vector<4x9xf32> to vector<4x9x1xf32>
    %32 = vector.broadcast %31 : vector<4x9x1xf32> to vector<4x9x9xf32>
    %33 = arith.subf %29, %32 : vector<4x9x9xf32>
    %34 = math.exp %33 : vector<4x9x9xf32>
    %cst_10 = arith.constant dense<0.000000e+00> : vector<4x9xf32>
    %35 = vector.multi_reduction <add>, %34, %cst_10 [2] : vector<4x9x9xf32> to vector<4x9xf32>
    %36 = vector.shape_cast %35 : vector<4x9xf32> to vector<4x9x1xf32>
    %37 = vector.broadcast %36 : vector<4x9x1xf32> to vector<4x9x9xf32>
    %38 = arith.divf %34, %37 : vector<4x9x9xf32>
    %c0_11 = arith.constant 0 : index
    %c0_12 = arith.constant 0 : index
    %c0_13 = arith.constant 0 : index
    %c0_14 = arith.constant 0 : index
    %c0_15 = arith.constant 0 : index
    %39 = vector.load %arg7[%c0_11, %c0_12, %c0_13, %c0_14, %c0_15] : memref<1x1x4x9x9xf32, #tpu.memory_space<vmem>>, vector<1x1x4x9x9xf32>
    %40 = vector.shape_cast %39 : vector<1x1x4x9x9xf32> to vector<4x9x9xf32>
    %41 = vector.shape_cast %38 : vector<4x9x9xf32> to vector<1x1x4x9x9xf32>
    tpu.vector_store %arg7[%c0_11, %c0_12, %c0_13, %c0_14, %c0_15], %41 {strides = array<i32>} : memref<1x1x4x9x9xf32, #tpu.memory_space<vmem>>, vector<1x1x4x9x9xf32>,
    "tpu.trace_start"() <{level = 10 : i32, message = "hlm,hmd->hld"}> : () -> ()
    %cst_16 = arith.constant dense<0.000000e+00> : vector<4x9x8xf32>
    %42 = tpu.matmul %38, %28, %cst_16 {dimension_numbers = #tpu.dot_dimension_numbers<[2], [1], [1], [2], [0, 0, 0, 1, 1, 2], [0], [0]>} : vector<4x9x9xf32>, vector<4x9x8xf32>, vector<4x9x8xf32> -> vector<4x9x8xf32>
    "tpu.trace_stop"() : () -> ()
    %43 = tpu.transpose %42, [1, 0, 2] : vector<4x9x8xf32> -> vector<9x4x8xf32>
    %44 = vector.shape_cast %43 : vector<9x4x8xf32> to vector<9x32xf32>
    %c0_17 = arith.constant 0 : index
    %c0_18 = arith.constant 0 : index
    %c0_19 = arith.constant 0 : index
    %45 = vector.load %arg4[%c0_17, %c0_18, %c0_19] : memref<1x32x32xf32, #tpu.memory_space<vmem>>, vector<1x32x32xf32>
    %46 = vector.shape_cast %45 : vector<1x32x32xf32> to vector<32x32xf32>
    %cst_20 = arith.constant dense<0.000000e+00> : vector<9x32xf32>
    %47 = tpu.matmul %44, %46, %cst_20 {dimension_numbers = #tpu.dot_dimension_numbers<[1], [0], [0], [1], [0, 0, 1, 1], [], []>} : vector<9x32xf32>, vector<32x32xf32>, vector<9x32xf32> -> vector<9x32xf32>
    %48 = vector.shape_cast %9 : vector<32xf32> to vector<1x32xf32>
    %49 = vector.broadcast %48 : vector<1x32xf32> to vector<9x32xf32>
    %50 = arith.addf %47, %49 : vector<9x32xf32>
    %51 = arith.addf %3, %50 : vector<9x32xf32>
    %cst_21 = arith.constant dense<0.000000e+00> : vector<9xf32>
    %52 = vector.multi_reduction <add>, %51, %cst_21 [1] : vector<9x32xf32> to vector<9xf32>
    %53 = vector.shape_cast %52 : vector<9xf32> to vector<9x1xf32>
    %cst_22 = arith.constant 3.200000e+01 : f32
    %54 = vector.broadcast %cst_22 : f32 to vector<9x1xf32>
    %55 = arith.divf %53, %54 : vector<9x1xf32>
    %56 = vector.broadcast %55 : vector<9x1xf32> to vector<9x32xf32>
    %57 = arith.subf %51, %56 : vector<9x32xf32>
    %58 = arith.mulf %57, %57 : vector<9x32xf32>
    %cst_23 = arith.constant dense<0.000000e+00> : vector<9xf32>
    %59 = vector.multi_reduction <add>, %58, %cst_23 [1] : vector<9x32xf32> to vector<9xf32>
    %60 = vector.shape_cast %59 : vector<9xf32> to vector<9x1xf32>
    %cst_24 = arith.constant 3.200000e+01 : f32
    %61 = vector.broadcast %cst_24 : f32 to vector<9x1xf32>
    %62 = arith.divf %60, %61 : vector<9x1xf32>
    %63 = vector.broadcast %55 : vector<9x1xf32> to vector<9x32xf32>
    %64 = arith.subf %51, %63 : vector<9x32xf32>
    %cst_25 = arith.constant 9.99999974E-6 : f32
    %65 = vector.broadcast %cst_25 : f32 to vector<9x1xf32>
    %66 = arith.addf %62, %65 : vector<9x1xf32>
    %67 = math.rsqrt %66 : vector<9x1xf32>
    %68 = vector.broadcast %67 : vector<9x1xf32> to vector<9x32xf32>
    %69 = arith.mulf %64, %68 : vector<9x32xf32>
    %70 = vector.shape_cast %11 : vector<32xf32> to vector<1x32xf32>
    %71 = vector.broadcast %70 : vector<1x32xf32> to vector<9x32xf32>
    %72 = arith.mulf %69, %71 : vector<9x32xf32>
    %73 = vector.shape_cast %13 : vector<32xf32> to vector<1x32xf32>
    %74 = vector.broadcast %73 : vector<1x32xf32> to vector<9x32xf32>
    %75 = arith.addf %72, %74 : vector<9x32xf32>
    %c0_26 = arith.constant 0 : index
    %c0_27 = arith.constant 0 : index
    %76 = vector.load %arg8[%c0_26, %c0_27] : memref<9x32xf32, #tpu.memory_space<vmem>>, vector<9x32xf32>
    tpu.vector_store %arg8[%c0_26, %c0_27], %75 {strides = array<i32>} : memref<9x32xf32, #tpu.memory_space<vmem>>, vector<9x32xf32>,
    %c0_28 = arith.constant 0 : index
    %c0_29 = arith.constant 0 : index
    %c0_30 = arith.constant 0 : index
    %c0_31 = arith.constant 0 : index
    %77 = vector.load %arg6[%c0_28, %c0_29, %c0_30, %c0_31] : memref<1x1x9x32xf32, #tpu.memory_space<vmem>>, vector<1x1x9x32xf32>
    %78 = vector.shape_cast %77 : vector<1x1x9x32xf32> to vector<9x32xf32>
    %79 = vector.shape_cast %75 : vector<9x32xf32> to vector<1x1x9x32xf32>
    tpu.vector_store %arg6[%c0_28, %c0_29, %c0_30, %c0_31], %79 {strides = array<i32>} : memref<1x1x9x32xf32, #tpu.memory_space<vmem>>, vector<1x1x9x32xf32>,
    return
  }
  func.func @transform_0(%arg0: i32, %arg1: i32) -> (i32, i32, i32) {
    %c0_i32 = arith.constant 0 : i32
    %c0_i32_0 = arith.constant 0 : i32
    %c0_i32_1 = arith.constant 0 : i32
    return %arg0, %c0_i32, %c0_i32_0 : i32, i32, i32
  }
  func.func @transform_1(%arg0: i32, %arg1: i32) -> (i32, i32, i32) {
    %c0_i32 = arith.constant 0 : i32
    %c0_i32_0 = arith.constant 0 : i32
    %c0_i32_1 = arith.constant 0 : i32
    return %arg1, %c0_i32, %c0_i32_0 : i32, i32, i32
  }
  func.func @transform_2(%arg0: i32, %arg1: i32) -> (i32, i32, i32) {
    %c0_i32 = arith.constant 0 : i32
    %c0_i32_0 = arith.constant 0 : i32
    %c0_i32_1 = arith.constant 0 : i32
    return %arg1, %c0_i32, %c0_i32_0 : i32, i32, i32
  }
  func.func @transform_3(%arg0: i32, %arg1: i32) -> (i32, i32, i32) {
    %c0_i32 = arith.constant 0 : i32
    %c0_i32_0 = arith.constant 0 : i32
    %c0_i32_1 = arith.constant 0 : i32
    return %arg1, %c0_i32, %c0_i32_0 : i32, i32, i32
  }
  func.func @transform_4(%arg0: i32, %arg1: i32) -> (i32, i32, i32, i32) {
    %c0_i32 = arith.constant 0 : i32
    %c0_i32_0 = arith.constant 0 : i32
    %c0_i32_1 = arith.constant 0 : i32
    return %arg1, %arg0, %c0_i32, %c0_i32_0 : i32, i32, i32, i32
  }
  func.func @transform_5(%arg0: i32, %arg1: i32) -> (i32, i32, i32, i32, i32) {
    %c0_i32 = arith.constant 0 : i32
    %c0_i32_0 = arith.constant 0 : i32
    %c0_i32_1 = arith.constant 0 : i32
    %c0_i32_2 = arith.constant 0 : i32
    return %arg1, %arg0, %c0_i32, %c0_i32_0, %c0_i32_1 : i32, i32, i32, i32, i32
  }
}

</mosaic_0001>

<llo_original>
// kernel: tpu_custom_call.1
$region0: #{tpu_custom_call.1}
  #allocation0 [shape = 'u32[]', space=smem, size = 0x4, offset = 0x4, fixed_abs, tag = 'smem constant byte address 0x4 - core index']
  #allocation1 [shape = 'u32[144,128]{1,0:T(1,128)}', space=vmem, size = 0x12000, scoped, tag = 'internal scratch']
  #allocation2 [shape = 'f32[9,32]{1,0:T(8,128)}', space=vmem, size = 0x2000, scoped, tag = 'scratch operand']
  %s0 = inlined_call_operand.vmem [shape: f32[2,9,32], index: 0, kind: input, shape index: {}]
  %s1 = inlined_call_operand.hbm [shape: f32[2,32,96], index: 1, kind: input, shape index: {}]
  %s2 = inlined_call_operand.hbm [shape: f32[2,32,32], index: 2, kind: input, shape index: {}]
  %s3 = inlined_call_operand.vmem [shape: f32[2,4,96], index: 3, kind: input, shape index: {}]
  %s4 = inlined_call_operand.vmem [shape: f32[2,2,9,32], index: 4, kind: output, shape index: {0}]
  %s5 = inlined_call_operand.vmem [shape: f32[2,2,4,9,9], index: 5, kind: output, shape index: {1}]
  %6 = xla_tuple %s4, %s5
  %s7 = sld [smem:[#allocation0]]
  $region69: #{tpu_custom_call.1} parent=0
    _
  %s9 = ssub.s32 1, %s7
  %s10 = scalar_select 0, %s9, %s7
  $region1: #{tpu_custom_call.1} parent=0
    #allocation3 [shape = 'u8[32768]{0}', space=vmem, size = 0x8000, scoped, tag = 'input window, operand 1']
    #allocation4 [shape = 's32[2]{0}', space=sflag, size = 0x8, scoped, tag = 'scoped memory for tpu_custom_call.1']
    #allocation5 [shape = 'u8[32768]{0}', space=vmem, size = 0x8000, scoped, tag = 'input window, operand 2']
    #allocation6 [shape = 's32[2]{0}', space=sflag, size = 0x8, scoped, tag = 'scoped memory for tpu_custom_call.1']
    %11 = vsyncpa [#allocation4], 0
    %s12 = scalar_lea.sflag [#allocation4], 1
    %13 = vsyncpa %s12, 0
    %14 = vsyncpa [#allocation6], 0
    %s15 = scalar_lea.sflag [#allocation6], 1
    %16 = vsyncpa %s15, 0
    loop: start=0, step=1, limit=6
    $region2: #{tpu_custom_call.1} parent=1 // loop_pre_header
      _
    $region3: #{tpu_custom_call.1} parent=1 // loop_header
      %s18 = sphi 0, %s22
      %p19 = scmp.ge.s32.totalorder %s18, 6
      %s25 = sphi 0, %s37
      %s26 = sphi 0, %s33
      %s27 = sphi 0, %s25
      %s28 = sphi 0, %s26
      %s29 = sphi 0, %s27
      %s30 = sphi 0, %s28
      %s40 = sphi 0, %s42
      %s43 = sphi 0, %s40
      %s44 = sphi 0, %s43
      %s60 = sphi 0, %s44
      %s66 = sphi 0, %s68
      %s69 = sphi 0, %s66
      %s70 = sphi 0, %s69
      %s86 = sphi 0, %s70
      %s92 = sphi 0, %s94
      %s95 = sphi 0, %s92
      %s96 = sphi 0, %s95
      %s112 = sphi 0, %s96
      %s118 = sphi 0, %s120
      %s121 = sphi 0, %s118
      %s122 = sphi 0, %s121
      %s138 = sphi 0, %s122
      %s146 = sphi 0, %s148
      %s149 = sphi 0, %s146
      %s150 = sphi 0, %s149
      %s166 = sphi 0, %s150
      %s174 = sphi 0, %s176
      %s177 = sphi 0, %s174
      %s178 = sphi 0, %s177
      %s194 = sphi 0, %s178
    $region4: #{tpu_custom_call.1} parent=1 // loop_header_branch
      %21 = sbr.rel (%p19) target = $region8
    $region5: #{tpu_custom_call.1} parent=1 // loop_body
      %s23 = ssub.s32 %s18, 1
      %s24 = ssub.s32 %s18, 2
      %s31 = sadd.s32 1, %s26
      %p32 = scmp.ge.s32.totalorder %s31, 2
      %s33 = scalar_select %p32, 0, %s31
      %s34 = sadd.s32 1, %s25
      %s35 = scalar_select %p32, %s34, %s25
      %p36 = scmp.ge.s32.totalorder %s35, 2
      %s37 = scalar_select %p36, 0, %s35
      %s38 = ssub.s32 %s25, %s37
      %p39 = scmp.eq.s32.totalorder %s38, 0
      %s41 = sadd.s32 %s40, 1
      %s42 = scalar_select %p39, %s40, %s41
      %p45 = pneg %p39
      %p46 = scmp.eq.s32.totalorder %s18, 3
      %p47 = por %p45, %p46
      %p48 = scmp.ne.s32.totalorder %s40, %s43
      %p49 = scmp.eq.s32.totalorder %s18, 0
      %p50 = por %p48, %p49
      %p51 = scmp.ne.s32.totalorder %s40, %s43
      %p52 = scmp.eq.s32.totalorder %s23, 3
      %p53 = por %p51, %p52
      %p54 = scmp.ne.s32.totalorder %s43, %s44
      %p55 = scmp.eq.s32.totalorder %s23, 0
      %p56 = por %p54, %p55
      %p57 = scmp.ne.s32.totalorder %s43, %s44
      %p58 = scmp.eq.s32.totalorder %s24, 3
      %p59 = por %p57, %p58
      %p61 = scmp.ne.s32.totalorder %s44, %s60
      %p62 = scmp.eq.s32.totalorder %s24, 0
      %p63 = por %p61, %p62
      %s64 = ssub.s32 %s26, %s33
      %p65 = scmp.eq.s32.totalorder %s64, 0
      %s67 = sadd.s32 %s66, 1
      %s68 = scalar_select %p65, %s66, %s67
      %p71 = pneg %p65
      %p72 = scmp.eq.s32.totalorder %s18, 3
      %p73 = por %p71, %p72
      %p74 = scmp.ne.s32.totalorder %s66, %s69
      %p75 = scmp.eq.s32.totalorder %s18, 0
      %p76 = por %p74, %p75
      %p77 = scmp.ne.s32.totalorder %s66, %s69
      %p78 = scmp.eq.s32.totalorder %s23, 3
      %p79 = por %p77, %p78
      %p80 = scmp.ne.s32.totalorder %s69, %s70
      %p81 = scmp.eq.s32.totalorder %s23, 0
      %p82 = por %p80, %p81
      %p83 = scmp.ne.s32.totalorder %s69, %s70
      %p84 = scmp.eq.s32.totalorder %s24, 3
      %p85 = por %p83, %p84
      %p87 = scmp.ne.s32.totalorder %s70, %s86
      %p88 = scmp.eq.s32.totalorder %s24, 0
      %p89 = por %p87, %p88
      %s90 = ssub.s32 %s26, %s33
      %p91 = scmp.eq.s32.totalorder %s90, 0
      %s93 = sadd.s32 %s92, 1
      %s94 = scalar_select %p91, %s92, %s93
      %p97 = pneg %p91
      %p98 = scmp.eq.s32.totalorder %s18, 3
      %p99 = por %p97, %p98
      %p100 = scmp.ne.s32.totalorder %s92, %s95
      %p101 = scmp.eq.s32.totalorder %s18, 0
      %p102 = por %p100, %p101
      %p103 = scmp.ne.s32.totalorder %s92, %s95
      %p104 = scmp.eq.s32.totalorder %s23, 3
      %p105 = por %p103, %p104
      %p106 = scmp.ne.s32.totalorder %s95, %s96
      %p107 = scmp.eq.s32.totalorder %s23, 0
      %p108 = por %p106, %p107
      %p109 = scmp.ne.s32.totalorder %s95, %s96
      %p110 = scmp.eq.s32.totalorder %s24, 3
      %p111 = por %p109, %p110
      %p113 = scmp.ne.s32.totalorder %s96, %s112
      %p114 = scmp.eq.s32.totalorder %s24, 0
      %p115 = por %p113, %p114
      %s116 = ssub.s32 %s26, %s33
      %p117 = scmp.eq.s32.totalorder %s116, 0
      %s119 = sadd.s32 %s118, 1
      %s120 = scalar_select %p117, %s118, %s119
      %p123 = pneg %p117
      %p124 = scmp.eq.s32.totalorder %s18, 3
      %p125 = por %p123, %p124
      %p126 = scmp.ne.s32.totalorder %s118, %s121
      %p127 = scmp.eq.s32.totalorder %s18, 0
      %p128 = por %p126, %p127
      %p129 = scmp.ne.s32.totalorder %s118, %s121
      %p130 = scmp.eq.s32.totalorder %s23, 3
      %p131 = por %p129, %p130
      %p132 = scmp.ne.s32.totalorder %s121, %s122
      %p133 = scmp.eq.s32.totalorder %s23, 0
      %p134 = por %p132, %p133
      %p135 = scmp.ne.s32.totalorder %s121, %s122
      %p136 = scmp.eq.s32.totalorder %s24, 3
      %p137 = por %p135, %p136
      %p139 = scmp.ne.s32.totalorder %s122, %s138
      %p140 = scmp.eq.s32.totalorder %s24, 0
      %p141 = por %p139, %p140
      %s142 = ssub.s32 %s26, %s33
      %s143 = ssub.s32 %s25, %s37
      %s144 = sor.u32 %s142, %s143
      %p145 = scmp.eq.s32.totalorder %s144, 0
      %s147 = sadd.s32 %s146, 1
      %s148 = scalar_select %p145, %s146, %s147
      %p151 = pneg %p145
      %p152 = scmp.eq.s32.totalorder %s18, 3
      %p153 = por %p151, %p152
      %p154 = scmp.ne.s32.totalorder %s146, %s149
      %p155 = scmp.eq.s32.totalorder %s18, 0
      %p156 = por %p154, %p155
      %p157 = scmp.ne.s32.totalorder %s146, %s149
      %p158 = scmp.eq.s32.totalorder %s23, 3
      %p159 = por %p157, %p158
      %p160 = scmp.ne.s32.totalorder %s149, %s150
      %p161 = scmp.eq.s32.totalorder %s23, 0
      %p162 = por %p160, %p161
      %p163 = scmp.ne.s32.totalorder %s149, %s150
      %p164 = scmp.eq.s32.totalorder %s24, 3
      %p165 = por %p163, %p164
      %p167 = scmp.ne.s32.totalorder %s150, %s166
      %p168 = scmp.eq.s32.totalorder %s24, 0
      %p169 = por %p167, %p168
      %s170 = ssub.s32 %s26, %s33
      %s171 = ssub.s32 %s25, %s37
      %s172 = sor.u32 %s170, %s171
      %p173 = scmp.eq.s32.totalorder %s172, 0
      %s175 = sadd.s32 %s174, 1
      %s176 = scalar_select %p173, %s174, %s175
      %p179 = pneg %p173
      %p180 = scmp.eq.s32.totalorder %s18, 3
      %p181 = por %p179, %p180
      %p182 = scmp.ne.s32.totalorder %s174, %s177
      %p183 = scmp.eq.s32.totalorder %s18, 0
      %p184 = por %p182, %p183
      %p185 = scmp.ne.s32.totalorder %s174, %s177
      %p186 = scmp.eq.s32.totalorder %s23, 3
      %p187 = por %p185, %p186
      %p188 = scmp.ne.s32.totalorder %s177, %s178
      %p189 = scmp.eq.s32.totalorder %s23, 0
      %p190 = por %p188, %p189
      %p191 = scmp.ne.s32.totalorder %s177, %s178
      %p192 = scmp.eq.s32.totalorder %s24, 3
      %p193 = por %p191, %p192
      %p195 = scmp.ne.s32.totalorder %s178, %s194
      %p196 = scmp.eq.s32.totalorder %s24, 0
      %p197 = por %p195, %p196
      %p198 = scmp.le.s32.totalorder 1, %s18
      %p199 = scmp.lt.s32.totalorder %s18, 5
      %p200 = pnand %p198, %p199
      %p201 = pneg %p200
      // Predicated region
      $region9: #{tpu_custom_call.1} parent=5 // pred_check
        _
      $region10: #{tpu_custom_call.1} parent=5 // pred_check_branch
        %203 = sbr.rel (%p200) target = $region12
      $region11: #{tpu_custom_call.1} parent=5 // pred_region
        %s204 = ssub.s32 %s18, 1
      $region12: #{tpu_custom_call.1} parent=5 // pred_fallthru
        _
      %p205 = scmp.lt.s32.totalorder %s18, 4
      // Predicated region
      $region13: #{tpu_custom_call.1} parent=5 // pred_check
        %p206 = pneg %p205
      $region14: #{tpu_custom_call.1} parent=5 // pred_check_branch
        %208 = sbr.rel (%p206) target = $region16
      $region15: #{tpu_custom_call.1} parent=5 // pred_region
        // Predicated region
        $region17: #{tpu_custom_call.1} parent=15 // pred_check
          %p209 = pneg %p50
        $region18: #{tpu_custom_call.1} parent=15 // pred_check_branch
          %211 = sbr.rel (%p209) target = $region20
        $region19: #{tpu_custom_call.1} parent=15 // pred_region
          %p212 = scmp.lt.s32.totalorder %s25, 1
          %s213 = scalar_select %p212, %s25, 1
          %s214 = smul.addr %s213, 2
          %s215 = smul.addr %s214, 8
          %s216 = scalar_lea.vmem %s0, %s215
        $region20: #{tpu_custom_call.1} parent=15 // pred_fallthru
          _
        // Predicated region
        $region21: #{tpu_custom_call.1} parent=15 // pred_check
          %p217 = pneg %p76
        $region22: #{tpu_custom_call.1} parent=15 // pred_check_branch
          %219 = sbr.rel (%p217) target = $region24
        $region23: #{tpu_custom_call.1} parent=15 // pred_region
          %s220 = sand.u32 %s66, 1
          %s221 = scalar_lea.sflag [#allocation4], %s220
          %s222 = sand.u32 %s66, 1
          %s223 = smul.addr %s222, 32
          %s224 = scalar_lea.vmem [#allocation3], %s223
          %s226 = ssub.s32 512, 512
          %227 = vsyncadd %s221, %s226
          %s228 = smul.addr %s26, 4
          %s229 = smul.addr %s228, 128
          %s230 = scalar_lea.hbm %s1, %s229
          %s231 = sshll.u32 %s224, 4
          %s232 = int_to_ptr.vmem [resolvable:$true] %s231
          %237 = dma.hbm_to_vmem [thread:$0]  %s230, 512, %s232, %s221, 128, 128, 8
        $region24: #{tpu_custom_call.1} parent=15 // pred_fallthru
          _
        // Predicated region
        $region25: #{tpu_custom_call.1} parent=15 // pred_check
          %p238 = pneg %p102
        $region26: #{tpu_custom_call.1} parent=15 // pred_check_branch
          %240 = sbr.rel (%p238) target = $region28
        $region27: #{tpu_custom_call.1} parent=15 // pred_region
          %s241 = sand.u32 %s92, 1
          %s242 = scalar_lea.sflag [#allocation6], %s241
          %s243 = sand.u32 %s92, 1
          %s244 = smul.addr %s243, 32
          %s245 = scalar_lea.vmem [#allocation5], %s244
          %s247 = ssub.s32 512, 512
          %248 = vsyncadd %s242, %s247
          %s249 = smul.addr %s26, 4
          %s250 = smul.addr %s249, 128
          %s251 = scalar_lea.hbm %s2, %s250
          %s252 = sshll.u32 %s245, 4
          %s253 = int_to_ptr.vmem [resolvable:$true] %s252
          %258 = dma.hbm_to_vmem [thread:$0]  %s251, 512, %s253, %s242, 128, 128, 8
        $region28: #{tpu_custom_call.1} parent=15 // pred_fallthru
          _
        // Predicated region
        $region29: #{tpu_custom_call.1} parent=15 // pred_check
          %p259 = pneg %p128
        $region30: #{tpu_custom_call.1} parent=15 // pred_check_branch
          %261 = sbr.rel (%p259) target = $region32
        $region31: #{tpu_custom_call.1} parent=15 // pred_region
          %p262 = scmp.lt.s32.totalorder %s26, 1
          %s263 = scalar_select %p262, %s26, 1
          %s264 = smul.addr %s263, 4
          %s265 = scalar_lea.vmem %s3, %s264
        $region32: #{tpu_custom_call.1} parent=15 // pred_fallthru
          _
      $region16: #{tpu_custom_call.1} parent=5 // pred_fallthru
        _
      %p266 = scmp.le.s32.totalorder 1, %s18
      %p267 = scmp.lt.s32.totalorder %s18, 5
      %p268 = pnand %p266, %p267
      %p269 = pneg %p268
      // Predicated region
      $region33: #{tpu_custom_call.1} parent=5 // pred_check
        _
      $region34: #{tpu_custom_call.1} parent=5 // pred_check_branch
        %271 = sbr.rel (%p268) target = $region36
      $region35: #{tpu_custom_call.1} parent=5 // pred_region
        %s272 = ssub.s32 %s18, 1
        %s273 = sand.u32 %s69, 1
        %s274 = scalar_lea.sflag [#allocation4], %s273
        %s275 = sand.u32 %s69, 1
        %s276 = smul.addr %s275, 32
        %s277 = scalar_lea.vmem [#allocation3], %s276
        // Predicated region
        $region37: #{tpu_custom_call.1} parent=35 // pred_check
          %p278 = pneg %p82
        $region38: #{tpu_custom_call.1} parent=35 // pred_check_branch
          %280 = sbr.rel (%p278) target = $region40
        $region39: #{tpu_custom_call.1} parent=35 // pred_region
          %281 = dma.done %s274, 512
        $region40: #{tpu_custom_call.1} parent=35 // pred_fallthru
          _
        %s282 = sand.u32 %s95, 1
        %s283 = scalar_lea.sflag [#allocation6], %s282
        %s284 = sand.u32 %s95, 1
        %s285 = smul.addr %s284, 32
        %s286 = scalar_lea.vmem [#allocation5], %s285
        // Predicated region
        $region41: #{tpu_custom_call.1} parent=35 // pred_check
          %p287 = pneg %p108
        $region42: #{tpu_custom_call.1} parent=35 // pred_check_branch
          %289 = sbr.rel (%p287) target = $region44
        $region43: #{tpu_custom_call.1} parent=35 // pred_region
          %290 = dma.done %s283, 512
        $region44: #{tpu_custom_call.1} parent=35 // pred_fallthru
          _
        %p291 = scmp.lt.s32.totalorder %s27, 1
        %s292 = scalar_select %p291, %s27, 1
        %s293 = smul.addr %s292, 2
        %s294 = smul.addr %s293, 8
        %s295 = scalar_lea.vmem %s0, %s294
        %p296 = pneg %p56
        %p297 = pneg %p53
        %s298 = sand.u32 %s69, 1
        %s299 = scalar_lea.sflag [#allocation4], %s298
        %s300 = sand.u32 %s69, 1
        %s301 = smul.addr %s300, 32
        %s302 = scalar_lea.vmem [#allocation3], %s301
        %p303 = pneg %p82
        %p304 = pneg %p79
        %s305 = sand.u32 %s95, 1
        %s306 = scalar_lea.sflag [#allocation6], %s305
        %s307 = sand.u32 %s95, 1
        %s308 = smul.addr %s307, 32
        %s309 = scalar_lea.vmem [#allocation5], %s308
        %p310 = pneg %p108
        %p311 = pneg %p105
        %p312 = scmp.lt.s32.totalorder %s28, 1
        %s313 = scalar_select %p312, %s28, 1
        %s314 = smul.addr %s313, 4
        %s315 = scalar_lea.vmem %s3, %s314
        %p316 = pneg %p134
        %p317 = pneg %p131
        %p318 = pneg %p162
        %p319 = pneg %p159
        %p320 = scmp.lt.s32.totalorder %s28, 1
        %s321 = scalar_select %p320, %s28, 1
        %p322 = scmp.lt.s32.totalorder %s27, 1
        %s323 = scalar_select %p322, %s27, 1
        %s324 = smul.addr %s323, 2
        %s325 = smul.addr %s321, 4
        %s326 = sadd.s32 %s324, %s325
        %s327 = smul.addr %s326, 8
        %s328 = scalar_lea.vmem %s4, %s327
        %p329 = pneg %p190
        %p330 = pneg %p187
        %p331 = scmp.lt.s32.totalorder %s28, 1
        %s332 = scalar_select %p331, %s28, 1
        %p333 = scmp.lt.s32.totalorder %s27, 1
        %s334 = scalar_select %p333, %s27, 1
        %s335 = smul.addr %s334, 8
        %s336 = smul.addr %s332, 16
        %s337 = sadd.s32 %s335, %s336
        %s338 = smul.addr %s337, 8
        %s339 = scalar_lea.vmem %s5, %s338
        %p340 = scmp.lt.s32.totalorder %s27, 1
        %s341 = scalar_select %p340, %s27, 1
        %s342 = smul.addr %s341, 2
        %s343 = smul.addr %s342, 8
        %s344 = scalar_lea.vmem %s0, %s343
        %p345 = scmp.lt.s32.totalorder %s28, 1
        %s346 = scalar_select %p345, %s28, 1
        %s347 = smul.addr %s346, 4
        %s348 = scalar_lea.vmem %s3, %s347
        %p349 = scmp.lt.s32.totalorder %s28, 1
        %s350 = scalar_select %p349, %s28, 1
        %p351 = scmp.lt.s32.totalorder %s27, 1
        %s352 = scalar_select %p351, %s27, 1
        %s353 = smul.addr %s352, 2
        %s354 = smul.addr %s350, 4
        %s355 = sadd.s32 %s353, %s354
        %s356 = smul.addr %s355, 8
        %s357 = scalar_lea.vmem %s4, %s356
        %p358 = scmp.lt.s32.totalorder %s28, 1
        %s359 = scalar_select %p358, %s28, 1
        %p360 = scmp.lt.s32.totalorder %s27, 1
        %s361 = scalar_select %p360, %s27, 1
        %s362 = smul.addr %s361, 8
        %s363 = smul.addr %s359, 16
        %s364 = sadd.s32 %s362, %s363
        %s365 = smul.addr %s364, 8
        %s366 = scalar_lea.vmem %s5, %s365
        %p367 = scmp.eq.s32.totalorder %s28, 0
        // Predicated region
        $region45: #{tpu_custom_call.1} parent=35 // pred_check
          %p368 = pneg %p367
        $region46: #{tpu_custom_call.1} parent=35 // pred_check_branch
          %370 = sbr.rel (%p368) target = $region48
        $region47: #{tpu_custom_call.1} parent=35 // pred_region
          %v371 = vld [vmem:[%s344] sm:$0xff]
          %v372 = vld [vmem:[%s344 + $0x8] sm:$0x1]
          %vm373 = vcmask 261120
          %374 = vst.msk [vmem:[#allocation2] sm:$0xff] %vm373, %v371
          %vm375 = vcmask 253952
          %376 = vst.msk [vmem:[#allocation2 + $0x8] sm:$0x1] %vm375, %v372
        $region48: #{tpu_custom_call.1} parent=35 // pred_fallthru
          _
        %v377 = vld [vmem:[#allocation2] sm:$0xff]
        %v378 = vld [vmem:[#allocation2 + $0x8] sm:$0x1]
        %v379 = vld [vmem:[%s348] sm:$0xf]
        %v380 = vld [vmem:[%s277] sm:$0xff]
        %v381 = vld [vmem:[%s277 + $0x8] sm:$0xff]
        %v382 = vld [vmem:[%s277 + $0x10] sm:$0xff]
        %v383 = vld [vmem:[%s277 + $0x18] sm:$0xff]
        %v384 = vlaneseq
        %v385 = vshrl.u32 %v384, 7
        %v386 = vsub.s32 0, %v385
        %v387 = vrot.slane %v379, %v386
        %vm388 = vcmask 261120
        %v390 = vsel %vm388, %v377, 0
        %v393 = vsel %vm388, %v378, 0
        %395 = vmatprep.subr.mxu0 0.0
        %396 = vmatpush1.msra.mxu0 %v380
        %397 = vmatprep.subr.mxu0 0.0
        %398 = vmatpush1.msra.mxu0 %v381
        %399 = vmatprep.subr.mxu0 0.0
        %400 = vmatpush1.msra.mxu0 %v382
        %401 = vmatprep.subr.mxu0 0.0
        %402 = vmatpush1.msra.mxu0 %v383
        %403 = vmatprep.subr.mxu0 0.0
        %404 = vmatpush1.msra.mxu0 0.0
        %405 = vmatprep.subr.mxu0 0.0
        %406 = vmatpush1.msra.mxu0 0.0
        %407 = vmatprep.subr.mxu0 0.0
        %408 = vmatpush1.msra.mxu0 0.0
        %409 = vmatprep.subr.mxu0 0.0
        %410 = vmatpush1.msra.mxu0 0.0
        %411 = vmatprep.subr.mxu0 0.0
        %412 = vmatpush1.msra.mxu0 0.0
        %413 = vmatprep.subr.mxu0 0.0
        %414 = vmatpush1.msra.mxu0 0.0
        %415 = vmatprep.subr.mxu0 0.0
        %416 = vmatpush1.msra.mxu0 0.0
        %417 = vmatprep.subr.mxu0 0.0
        %418 = vmatpush1.msra.mxu0 0.0
        %419 = vmatprep.subr.mxu0 0.0
        %420 = vmatpush1.msra.mxu0 0.0
        %421 = vmatprep.subr.mxu0 0.0
        %422 = vmatpush1.msra.mxu0 0.0
        %423 = vmatprep.subr.mxu0 0.0
        %424 = vmatpush1.msra.mxu0 0.0
        %425 = vmatprep.subr.mxu0 0.0
        %426 = vmatpush1.msra.mxu0 0.0
        %427 = vmatprep.subr.mxu0 0.0
        %428 = vmatpush1.msra.mxu0 0.0
        %429 = vmatprep.subr.mxu0 0.0
        %430 = vmatpush1.msra.mxu0 0.0
        %431 = vmatprep.subr.mxu0 0.0
        %432 = vmatpush1.msra.mxu0 0.0
        %433 = vmatprep.subr.mxu0 0.0
        %434 = vmatpush1.msra.mxu0 0.0
        %435 = vmatprep.subr.mxu0 0.0
        %436 = vmatpush1.msra.mxu0 0.0
        %437 = vmatprep.subr.mxu0 0.0
        %438 = vmatpush1.msra.mxu0 0.0
        %439 = vmatprep.subr.mxu0 0.0
        %440 = vmatpush1.msra.mxu0 0.0
        %441 = vmatprep.subr.mxu0 0.0
        %442 = vmatpush1.msra.mxu0 0.0
        %443 = vmatprep.subr.mxu0 0.0
        %444 = vmatpush1.msra.mxu0 0.0
        %445 = vmatprep.subr.mxu0 0.0
        %446 = vmatpush1.msra.mxu0 0.0
        %447 = vmatprep.subr.mxu0 0.0
        %448 = vmatpush1.msra.mxu0 0.0
        %449 = vmatprep.subr.mxu0 0.0
        %450 = vmatpush1.msra.mxu0 0.0
        %451 = vmatprep.subr.mxu0 0.0
        %452 = vmatpush1.msra.mxu0 0.0
        %453 = vmatprep.subr.mxu0 0.0
        %454 = vmatpush1.msra.mxu0 0.0
        %455 = vmatprep.subr.mxu0 0.0
        %456 = vmatpush1.msra.mxu0 0.0
        %457 = vmatprep.subr.mxu0 0.0
        %458 = vmatpush1.msra.mxu0 0.0
        %459 = vmatprep.mubr.f32.mxu0 0.0
        %460 = vmatmul.mubr.f32.gmra.mrb[0].mxu0 %v390
        %v461 = vpop.f32.mrb[0].mxu0
        %v462 = vadd.f32 %v387, %v461
        %v463 = vpop.f32.mrb[0].mxu0
        %464 = vmatprep.mubr.f32.mxu0 0.0
        %465 = vmatmul.mubr.f32.gmra.mrb[0].mxu0 %v393
        %v466 = vpop.f32.mrb[0].mxu0
        %v467 = vadd.f32 %v387, %v466
        %v468 = vpop.f32.mrb[0].mxu0
        %469 = vdwg.mxu0
        %472 = vrot.lane.b32.xlu0 %v462, 120
        %v473 = vpop.permute.xlu0 %472
        %474 = vrot.lane.b32.xlu0 %v467, 120
        %v475 = vpop.permute.xlu0 %474
        %478 = vrot.lane.b32.xlu0 %v462, 112
        %v479 = vpop.permute.xlu0 %478
        %480 = vrot.lane.b32.xlu0 %v467, 112
        %v481 = vpop.permute.xlu0 %480
        %484 = vrot.lane.b32.xlu0 %v462, 104
        %v485 = vpop.permute.xlu0 %484
        %486 = vrot.lane.b32.xlu0 %v467, 104
        %v487 = vpop.permute.xlu0 %486
        %v490 = vcombine.low %v462, %v479
        %v491 = vcombine.high %v462, %v479
        %v493 = vunpack.c.l.s4 1983009808
        %v494 = vunpack.c.0.s8 %v493
        %v495 = vlaneseq
        %v496 = vshrl.u32 %v495, 7
        %v497 = vsub.s32 %v494, %v496
        %v498 = vrot.slane %v490, %v497
        %v500 = vunpack.c.l.s4 1983009808
        %v501 = vunpack.c.0.s8 %v500
        %v502 = vlaneseq
        %v503 = vshrl.u32 %v502, 7
        %v504 = vsub.s32 %v501, %v503
        %v505 = vrot.slane %v491, %v504
        %v506 = vcombine.low %v473, %v485
        %v507 = vcombine.high %v473, %v485
        %v509 = vunpack.c.l.s4 1983009808
        %v510 = vunpack.c.0.s8 %v509
        %v511 = vlaneseq
        %v512 = vshrl.u32 %v511, 7
        %v513 = vsub.s32 %v510, %v512
        %v514 = vrot.slane %v506, %v513
        %v516 = vunpack.c.l.s4 1983009808
        %v517 = vunpack.c.0.s8 %v516
        %v518 = vlaneseq
        %v519 = vshrl.u32 %v518, 7
        %v520 = vsub.s32 %v517, %v519
        %v521 = vrot.slane %v507, %v520
        %v522 = vcombine.low %v498, %v514
        %v523 = vcombine.high %v498, %v514
        %v525 = vunpack.c.l.s4 1934713408
        %v526 = vunpack.c.0.s8 %v525
        %v527 = vlaneseq
        %v528 = vshrl.u32 %v527, 7
        %v529 = vsub.s32 %v526, %v528
        %v530 = vrot.slane %v522, %v529
        %v532 = vunpack.c.l.s4 1934713408
        %v533 = vunpack.c.0.s8 %v532
        %v534 = vlaneseq
        %v535 = vshrl.u32 %v534, 7
        %v536 = vsub.s32 %v533, %v535
        %v537 = vrot.slane %v523, %v536
        %v538 = vcombine.low %v505, %v521
        %v539 = vcombine.high %v505, %v521
        %v541 = vunpack.c.l.s4 1934713408
        %v542 = vunpack.c.0.s8 %v541
        %v543 = vlaneseq
        %v544 = vshrl.u32 %v543, 7
        %v545 = vsub.s32 %v542, %v544
        %v546 = vrot.slane %v538, %v545
        %v548 = vunpack.c.l.s4 1934713408
        %v549 = vunpack.c.0.s8 %v548
        %v550 = vlaneseq
        %v551 = vshrl.u32 %v550, 7
        %v552 = vsub.s32 %v549, %v551
        %v553 = vrot.slane %v539, %v552
        %v554 = vcombine.high %v530, 0.0
        %v555 = vcombine.high %v537, 0.0
        %v556 = vcombine.high %v546, 0.0
        %v557 = vcombine.high %v553, 0.0
        %v558 = vcombine.low %v467, %v481
        %v560 = vunpack.c.l.s4 1983009808
        %v561 = vunpack.c.0.s8 %v560
        %v562 = vlaneseq
        %v563 = vshrl.u32 %v562, 7
        %v564 = vsub.s32 %v561, %v563
        %v565 = vrot.slane %v558, %v564
        %v566 = vcombine.low %v475, %v487
        %v568 = vunpack.c.l.s4 1983009808
        %v569 = vunpack.c.0.s8 %v568
        %v570 = vlaneseq
        %v571 = vshrl.u32 %v570, 7
        %v572 = vsub.s32 %v569, %v571
        %v573 = vrot.slane %v566, %v572
        %v574 = vcombine.low %v565, %v573
        %v575 = vcombine.low %v530, %v537
        %v577 = vunpack.c.l.s4 1983009808
        %v578 = vunpack.c.0.s8 %v577
        %v579 = vlaneseq
        %v580 = vshrl.u32 %v579, 7
        %v581 = vsub.s32 %v578, %v580
        %v582 = vrot.slane %v575, %v581
        %v583 = vcombine.low %v554, %v555
        %v585 = vunpack.c.l.s4 1983009808
        %v586 = vunpack.c.0.s8 %v585
        %v587 = vlaneseq
        %v588 = vshrl.u32 %v587, 7
        %v589 = vsub.s32 %v586, %v588
        %v590 = vrot.slane %v583, %v589
        %v591 = vcombine.low %v546, %v553
        %v593 = vunpack.c.l.s4 1983009808
        %v594 = vunpack.c.0.s8 %v593
        %v595 = vlaneseq
        %v596 = vshrl.u32 %v595, 7
        %v597 = vsub.s32 %v594, %v596
        %v598 = vrot.slane %v591, %v597
        %v599 = vcombine.low %v556, %v557
        %v601 = vunpack.c.l.s4 1983009808
        %v602 = vunpack.c.0.s8 %v601
        %v603 = vlaneseq
        %v604 = vshrl.u32 %v603, 7
        %v605 = vsub.s32 %v602, %v604
        %v606 = vrot.slane %v599, %v605
        %v607 = vcombine.low %v582, %v590
        %v608 = vcombine.high %v582, %v590
        %v610 = vunpack.c.l.s4 1934713408
        %v611 = vunpack.c.0.s8 %v610
        %v612 = vlaneseq
        %v613 = vshrl.u32 %v612, 7
        %v614 = vsub.s32 %v611, %v613
        %v615 = vrot.slane %v607, %v614
        %v617 = vunpack.c.l.s4 1934713408
        %v618 = vunpack.c.0.s8 %v617
        %v619 = vlaneseq
        %v620 = vshrl.u32 %v619, 7
        %v621 = vsub.s32 %v618, %v620
        %v622 = vrot.slane %v608, %v621
        %v623 = vcombine.low %v598, %v606
        %v624 = vcombine.high %v598, %v606
        %v626 = vunpack.c.l.s4 1934713408
        %v627 = vunpack.c.0.s8 %v626
        %v628 = vlaneseq
        %v629 = vshrl.u32 %v628, 7
        %v630 = vsub.s32 %v627, %v629
        %v631 = vrot.slane %v623, %v630
        %v633 = vunpack.c.l.s4 1934713408
        %v634 = vunpack.c.0.s8 %v633
        %v635 = vlaneseq
        %v636 = vshrl.u32 %v635, 7
        %v637 = vsub.s32 %v634, %v636
        %v638 = vrot.slane %v624, %v637
        %v639 = vcombine.low %v615, %v631
        %v640 = vcombine.high %v615, %v631
        %v641 = vcombine.low %v622, %v638
        %v642 = vcombine.high %v622, %v638
        %v644 = vunpack.c.l.s4 1934713408
        %v645 = vunpack.c.0.s8 %v644
        %v646 = vlaneseq
        %v647 = vshrl.u32 %v646, 7
        %v648 = vsub.s32 %v645, %v647
        %v649 = vrot.slane %v574, %v648
        %v651 = vunpack.c.l.s4 1983009808
        %v652 = vunpack.c.0.s8 %v651
        %v653 = vlaneseq
        %v654 = vshrl.u32 %v653, 7
        %v655 = vsub.s32 %v652, %v654
        %v656 = vrot.slane %v649, %v655
        %v657 = vcombine.high %v656, 0.0
        %v659 = vunpack.c.l.s4 1934713408
        %v660 = vunpack.c.0.s8 %v659
        %v661 = vlaneseq
        %v662 = vshrl.u32 %v661, 7
        %v663 = vsub.s32 %v660, %v662
        %v664 = vrot.slane %v656, %v663
        %v666 = vunpack.c.l.s4 1934713408
        %v667 = vunpack.c.0.s8 %v666
        %v668 = vlaneseq
        %v669 = vshrl.u32 %v668, 7
        %v670 = vsub.s32 %v667, %v669
        %v671 = vrot.slane %v657, %v670
        %v672 = vcombine.high %v664, 0.0
        %v673 = vcombine.high %v671, 0.0
        %674 = vrot.lane.b32.xlu0 %v462, 96
        %v675 = vpop.permute.xlu0 %674
        %676 = vrot.lane.b32.xlu0 %v467, 96
        %v677 = vpop.permute.xlu0 %676
        %678 = vrot.lane.b32.xlu0 %v473, 96
        %v679 = vpop.permute.xlu0 %678
        %680 = vrot.lane.b32.xlu0 %v475, 96
        %v681 = vpop.permute.xlu0 %680
        %682 = vrot.lane.b32.xlu0 %v479, 96
        %v683 = vpop.permute.xlu0 %682
        %684 = vrot.lane.b32.xlu0 %v481, 96
        %v685 = vpop.permute.xlu0 %684
        %686 = vrot.lane.b32.xlu0 %v485, 96
        %v687 = vpop.permute.xlu0 %686
        %688 = vrot.lane.b32.xlu0 %v487, 96
        %v689 = vpop.permute.xlu0 %688
        %v698 = vcombine.low %v675, %v683
        %v699 = vcombine.high %v675, %v683
        %v701 = vunpack.c.l.s4 1983009808
        %v702 = vunpack.c.0.s8 %v701
        %v703 = vlaneseq
        %v704 = vshrl.u32 %v703, 7
        %v705 = vsub.s32 %v702, %v704
        %v706 = vrot.slane %v698, %v705
        %v708 = vunpack.c.l.s4 1983009808
        %v709 = vunpack.c.0.s8 %v708
        %v710 = vlaneseq
        %v711 = vshrl.u32 %v710, 7
        %v712 = vsub.s32 %v709, %v711
        %v713 = vrot.slane %v699, %v712
        %v714 = vcombine.low %v679, %v687
        %v715 = vcombine.high %v679, %v687
        %v717 = vunpack.c.l.s4 1983009808
        %v718 = vunpack.c.0.s8 %v717
        %v719 = vlaneseq
        %v720 = vshrl.u32 %v719, 7
        %v721 = vsub.s32 %v718, %v720
        %v722 = vrot.slane %v714, %v721
        %v724 = vunpack.c.l.s4 1983009808
        %v725 = vunpack.c.0.s8 %v724
        %v726 = vlaneseq
        %v727 = vshrl.u32 %v726, 7
        %v728 = vsub.s32 %v725, %v727
        %v729 = vrot.slane %v715, %v728
        %v730 = vcombine.low %v706, %v722
        %v731 = vcombine.high %v706, %v722
        %v733 = vunpack.c.l.s4 1934713408
        %v734 = vunpack.c.0.s8 %v733
        %v735 = vlaneseq
        %v736 = vshrl.u32 %v735, 7
        %v737 = vsub.s32 %v734, %v736
        %v738 = vrot.slane %v730, %v737
        %v740 = vunpack.c.l.s4 1934713408
        %v741 = vunpack.c.0.s8 %v740
        %v742 = vlaneseq
        %v743 = vshrl.u32 %v742, 7
        %v744 = vsub.s32 %v741, %v743
        %v745 = vrot.slane %v731, %v744
        %v746 = vcombine.low %v713, %v729
        %v747 = vcombine.high %v713, %v729
        %v749 = vunpack.c.l.s4 1934713408
        %v750 = vunpack.c.0.s8 %v749
        %v751 = vlaneseq
        %v752 = vshrl.u32 %v751, 7
        %v753 = vsub.s32 %v750, %v752
        %v754 = vrot.slane %v746, %v753
        %v756 = vunpack.c.l.s4 1934713408
        %v757 = vunpack.c.0.s8 %v756
        %v758 = vlaneseq
        %v759 = vshrl.u32 %v758, 7
        %v760 = vsub.s32 %v757, %v759
        %v761 = vrot.slane %v747, %v760
        %v762 = vcombine.high %v738, 0.0
        %v763 = vcombine.high %v745, 0.0
        %v764 = vcombine.high %v754, 0.0
        %v765 = vcombine.high %v761, 0.0
        %v766 = vcombine.low %v677, %v685
        %v768 = vunpack.c.l.s4 1983009808
        %v769 = vunpack.c.0.s8 %v768
        %v770 = vlaneseq
        %v771 = vshrl.u32 %v770, 7
        %v772 = vsub.s32 %v769, %v771
        %v773 = vrot.slane %v766, %v772
        %v774 = vcombine.low %v681, %v689
        %v776 = vunpack.c.l.s4 1983009808
        %v777 = vunpack.c.0.s8 %v776
        %v778 = vlaneseq
        %v779 = vshrl.u32 %v778, 7
        %v780 = vsub.s32 %v777, %v779
        %v781 = vrot.slane %v774, %v780
        %v782 = vcombine.low %v773, %v781
        %v783 = vcombine.low %v738, %v745
        %v785 = vunpack.c.l.s4 1983009808
        %v786 = vunpack.c.0.s8 %v785
        %v787 = vlaneseq
        %v788 = vshrl.u32 %v787, 7
        %v789 = vsub.s32 %v786, %v788
        %v790 = vrot.slane %v783, %v789
        %v791 = vcombine.low %v762, %v763
        %v793 = vunpack.c.l.s4 1983009808
        %v794 = vunpack.c.0.s8 %v793
        %v795 = vlaneseq
        %v796 = vshrl.u32 %v795, 7
        %v797 = vsub.s32 %v794, %v796
        %v798 = vrot.slane %v791, %v797
        %v799 = vcombine.low %v754, %v761
        %v801 = vunpack.c.l.s4 1983009808
        %v802 = vunpack.c.0.s8 %v801
        %v803 = vlaneseq
        %v804 = vshrl.u32 %v803, 7
        %v805 = vsub.s32 %v802, %v804
        %v806 = vrot.slane %v799, %v805
        %v807 = vcombine.low %v764, %v765
        %v809 = vunpack.c.l.s4 1983009808
        %v810 = vunpack.c.0.s8 %v809
        %v811 = vlaneseq
        %v812 = vshrl.u32 %v811, 7
        %v813 = vsub.s32 %v810, %v812
        %v814 = vrot.slane %v807, %v813
        %v815 = vcombine.low %v790, %v798
        %v816 = vcombine.high %v790, %v798
        %v818 = vunpack.c.l.s4 1934713408
        %v819 = vunpack.c.0.s8 %v818
        %v820 = vlaneseq
        %v821 = vshrl.u32 %v820, 7
        %v822 = vsub.s32 %v819, %v821
        %v823 = vrot.slane %v815, %v822
        %v825 = vunpack.c.l.s4 1934713408
        %v826 = vunpack.c.0.s8 %v825
        %v827 = vlaneseq
        %v828 = vshrl.u32 %v827, 7
        %v829 = vsub.s32 %v826, %v828
        %v830 = vrot.slane %v816, %v829
        %v831 = vcombine.low %v806, %v814
        %v832 = vcombine.high %v806, %v814
        %v834 = vunpack.c.l.s4 1934713408
        %v835 = vunpack.c.0.s8 %v834
        %v836 = vlaneseq
        %v837 = vshrl.u32 %v836, 7
        %v838 = vsub.s32 %v835, %v837
        %v839 = vrot.slane %v831, %v838
        %v841 = vunpack.c.l.s4 1934713408
        %v842 = vunpack.c.0.s8 %v841
        %v843 = vlaneseq
        %v844 = vshrl.u32 %v843, 7
        %v845 = vsub.s32 %v842, %v844
        %v846 = vrot.slane %v832, %v845
        %v847 = vcombine.low %v823, %v839
        %v848 = vcombine.high %v823, %v839
        %v849 = vcombine.low %v830, %v846
        %v850 = vcombine.high %v830, %v846
        %v852 = vunpack.c.l.s4 1934713408
        %v853 = vunpack.c.0.s8 %v852
        %v854 = vlaneseq
        %v855 = vshrl.u32 %v854, 7
        %v856 = vsub.s32 %v853, %v855
        %v857 = vrot.slane %v782, %v856
        %v859 = vunpack.c.l.s4 1983009808
        %v860 = vunpack.c.0.s8 %v859
        %v861 = vlaneseq
        %v862 = vshrl.u32 %v861, 7
        %v863 = vsub.s32 %v860, %v862
        %v864 = vrot.slane %v857, %v863
        %v865 = vcombine.high %v864, 0.0
        %v867 = vunpack.c.l.s4 1934713408
        %v868 = vunpack.c.0.s8 %v867
        %v869 = vlaneseq
        %v870 = vshrl.u32 %v869, 7
        %v871 = vsub.s32 %v868, %v870
        %v872 = vrot.slane %v864, %v871
        %v874 = vunpack.c.l.s4 1934713408
        %v875 = vunpack.c.0.s8 %v874
        %v876 = vlaneseq
        %v877 = vshrl.u32 %v876, 7
        %v878 = vsub.s32 %v875, %v877
        %v879 = vrot.slane %v865, %v878
        %v880 = vcombine.high %v872, 0.0
        %v881 = vcombine.high %v879, 0.0
        %882 = vrot.lane.b32.xlu0 %v462, 64
        %v883 = vpop.permute.xlu0 %882
        %884 = vrot.lane.b32.xlu0 %v467, 64
        %v885 = vpop.permute.xlu0 %884
        %886 = vrot.lane.b32.xlu0 %v473, 64
        %v887 = vpop.permute.xlu0 %886
        %888 = vrot.lane.b32.xlu0 %v475, 64
        %v889 = vpop.permute.xlu0 %888
        %890 = vrot.lane.b32.xlu0 %v479, 64
        %v891 = vpop.permute.xlu0 %890
        %892 = vrot.lane.b32.xlu0 %v481, 64
        %v893 = vpop.permute.xlu0 %892
        %894 = vrot.lane.b32.xlu0 %v485, 64
        %v895 = vpop.permute.xlu0 %894
        %896 = vrot.lane.b32.xlu0 %v487, 64
        %v897 = vpop.permute.xlu0 %896
        %v906 = vcombine.low %v883, %v891
        %v907 = vcombine.high %v883, %v891
        %v909 = vunpack.c.l.s4 1983009808
        %v910 = vunpack.c.0.s8 %v909
        %v911 = vlaneseq
        %v912 = vshrl.u32 %v911, 7
        %v913 = vsub.s32 %v910, %v912
        %v914 = vrot.slane %v906, %v913
        %v916 = vunpack.c.l.s4 1983009808
        %v917 = vunpack.c.0.s8 %v916
        %v918 = vlaneseq
        %v919 = vshrl.u32 %v918, 7
        %v920 = vsub.s32 %v917, %v919
        %v921 = vrot.slane %v907, %v920
        %v922 = vcombine.low %v887, %v895
        %v923 = vcombine.high %v887, %v895
        %v925 = vunpack.c.l.s4 1983009808
        %v926 = vunpack.c.0.s8 %v925
        %v927 = vlaneseq
        %v928 = vshrl.u32 %v927, 7
        %v929 = vsub.s32 %v926, %v928
        %v930 = vrot.slane %v922, %v929
        %v932 = vunpack.c.l.s4 1983009808
        %v933 = vunpack.c.0.s8 %v932
        %v934 = vlaneseq
        %v935 = vshrl.u32 %v934, 7
        %v936 = vsub.s32 %v933, %v935
        %v937 = vrot.slane %v923, %v936
        %v938 = vcombine.low %v914, %v930
        %v939 = vcombine.high %v914, %v930
        %v941 = vunpack.c.l.s4 1934713408
        %v942 = vunpack.c.0.s8 %v941
        %v943 = vlaneseq
        %v944 = vshrl.u32 %v943, 7
        %v945 = vsub.s32 %v942, %v944
        %v946 = vrot.slane %v938, %v945
        %v948 = vunpack.c.l.s4 1934713408
        %v949 = vunpack.c.0.s8 %v948
        %v950 = vlaneseq
        %v951 = vshrl.u32 %v950, 7
        %v952 = vsub.s32 %v949, %v951
        %v953 = vrot.slane %v939, %v952
        %v954 = vcombine.low %v921, %v937
        %v955 = vcombine.high %v921, %v937
        %v957 = vunpack.c.l.s4 1934713408
        %v958 = vunpack.c.0.s8 %v957
        %v959 = vlaneseq
        %v960 = vshrl.u32 %v959, 7
        %v961 = vsub.s32 %v958, %v960
        %v962 = vrot.slane %v954, %v961
        %v964 = vunpack.c.l.s4 1934713408
        %v965 = vunpack.c.0.s8 %v964
        %v966 = vlaneseq
        %v967 = vshrl.u32 %v966, 7
        %v968 = vsub.s32 %v965, %v967
        %v969 = vrot.slane %v955, %v968
        %v970 = vcombine.high %v946, 0.0
        %v971 = vcombine.high %v953, 0.0
        %v972 = vcombine.high %v962, 0.0
        %v973 = vcombine.high %v969, 0.0
        %v974 = vcombine.low %v885, %v893
        %v976 = vunpack.c.l.s4 1983009808
        %v977 = vunpack.c.0.s8 %v976
        %v978 = vlaneseq
        %v979 = vshrl.u32 %v978, 7
        %v980 = vsub.s32 %v977, %v979
        %v981 = vrot.slane %v974, %v980
        %v982 = vcombine.low %v889, %v897
        %v984 = vunpack.c.l.s4 1983009808
        %v985 = vunpack.c.0.s8 %v984
        %v986 = vlaneseq
        %v987 = vshrl.u32 %v986, 7
        %v988 = vsub.s32 %v985, %v987
        %v989 = vrot.slane %v982, %v988
        %v990 = vcombine.low %v981, %v989
        %v991 = vcombine.low %v946, %v953
        %v993 = vunpack.c.l.s4 1983009808
        %v994 = vunpack.c.0.s8 %v993
        %v995 = vlaneseq
        %v996 = vshrl.u32 %v995, 7
        %v997 = vsub.s32 %v994, %v996
        %v998 = vrot.slane %v991, %v997
        %v999 = vcombine.low %v970, %v971
        %v1001 = vunpack.c.l.s4 1983009808
        %v1002 = vunpack.c.0.s8 %v1001
        %v1003 = vlaneseq
        %v1004 = vshrl.u32 %v1003, 7
        %v1005 = vsub.s32 %v1002, %v1004
        %v1006 = vrot.slane %v999, %v1005
        %v1007 = vcombine.low %v962, %v969
        %v1009 = vunpack.c.l.s4 1983009808
        %v1010 = vunpack.c.0.s8 %v1009
        %v1011 = vlaneseq
        %v1012 = vshrl.u32 %v1011, 7
        %v1013 = vsub.s32 %v1010, %v1012
        %v1014 = vrot.slane %v1007, %v1013
        %v1015 = vcombine.low %v972, %v973
        %v1017 = vunpack.c.l.s4 1983009808
        %v1018 = vunpack.c.0.s8 %v1017
        %v1019 = vlaneseq
        %v1020 = vshrl.u32 %v1019, 7
        %v1021 = vsub.s32 %v1018, %v1020
        %v1022 = vrot.slane %v1015, %v1021
        %v1023 = vcombine.low %v998, %v1006
        %v1024 = vcombine.high %v998, %v1006
        %v1026 = vunpack.c.l.s4 1934713408
        %v1027 = vunpack.c.0.s8 %v1026
        %v1028 = vlaneseq
        %v1029 = vshrl.u32 %v1028, 7
        %v1030 = vsub.s32 %v1027, %v1029
        %v1031 = vrot.slane %v1023, %v1030
        %v1033 = vunpack.c.l.s4 1934713408
        %v1034 = vunpack.c.0.s8 %v1033
        %v1035 = vlaneseq
        %v1036 = vshrl.u32 %v1035, 7
        %v1037 = vsub.s32 %v1034, %v1036
        %v1038 = vrot.slane %v1024, %v1037
        %v1039 = vcombine.low %v1014, %v1022
        %v1040 = vcombine.high %v1014, %v1022
        %v1042 = vunpack.c.l.s4 1934713408
        %v1043 = vunpack.c.0.s8 %v1042
        %v1044 = vlaneseq
        %v1045 = vshrl.u32 %v1044, 7
        %v1046 = vsub.s32 %v1043, %v1045
        %v1047 = vrot.slane %v1039, %v1046
        %v1049 = vunpack.c.l.s4 1934713408
        %v1050 = vunpack.c.0.s8 %v1049
        %v1051 = vlaneseq
        %v1052 = vshrl.u32 %v1051, 7
        %v1053 = vsub.s32 %v1050, %v1052
        %v1054 = vrot.slane %v1040, %v1053
        %v1055 = vcombine.low %v1031, %v1047
        %v1056 = vcombine.high %v1031, %v1047
        %v1057 = vcombine.low %v1038, %v1054
        %v1058 = vcombine.high %v1038, %v1054
        %v1060 = vunpack.c.l.s4 1934713408
        %v1061 = vunpack.c.0.s8 %v1060
        %v1062 = vlaneseq
        %v1063 = vshrl.u32 %v1062, 7
        %v1064 = vsub.s32 %v1061, %v1063
        %v1065 = vrot.slane %v990, %v1064
        %v1067 = vunpack.c.l.s4 1983009808
        %v1068 = vunpack.c.0.s8 %v1067
        %v1069 = vlaneseq
        %v1070 = vshrl.u32 %v1069, 7
        %v1071 = vsub.s32 %v1068, %v1070
        %v1072 = vrot.slane %v1065, %v1071
        %v1073 = vcombine.high %v1072, 0.0
        %v1075 = vunpack.c.l.s4 1934713408
        %v1076 = vunpack.c.0.s8 %v1075
        %v1077 = vlaneseq
        %v1078 = vshrl.u32 %v1077, 7
        %v1079 = vsub.s32 %v1076, %v1078
        %v1080 = vrot.slane %v1072, %v1079
        %v1082 = vunpack.c.l.s4 1934713408
        %v1083 = vunpack.c.0.s8 %v1082
        %v1084 = vlaneseq
        %v1085 = vshrl.u32 %v1084, 7
        %v1086 = vsub.s32 %v1083, %v1085
        %v1087 = vrot.slane %v1073, %v1086
        %v1088 = vcombine.high %v1080, 0.0
        %v1089 = vcombine.high %v1087, 0.0
        %vm1090 = vcmask 64512
        %v1092 = vsel %vm1090, %v639, 0
        %v1095 = vsel %vm1090, %v664, 0
        %v1098 = vsel %vm1090, %v847, 0
        %v1101 = vsel %vm1090, %v872, 0
        %1103 = vmatprep.subr.mxu0 0.0
        %1104 = vmatpush1.xpose.msra.mxu0 %v1098
        %1105 = vmatprep.subr.mxu0 0.0
        %1106 = vmatpush1.xpose.msra.mxu0 %v1101
        %1107 = vmatprep.subr.mxu0 0.0
        %1108 = vmatpush1.xpose.msra.mxu0 0.0
        %1109 = vmatprep.subr.mxu0 0.0
        %1110 = vmatpush1.xpose.msra.mxu0 0.0
        %1111 = vmatprep.subr.mxu0 0.0
        %1112 = vmatpush1.xpose.msra.mxu0 0.0
        %1113 = vmatprep.subr.mxu0 0.0
        %1114 = vmatpush1.xpose.msra.mxu0 0.0
        %1115 = vmatprep.subr.mxu0 0.0
        %1116 = vmatpush1.xpose.msra.mxu0 0.0
        %1117 = vmatprep.subr.mxu0 0.0
        %1118 = vmatpush1.xpose.msra.mxu0 0.0
        %1119 = vmatprep.subr.mxu0 0.0
        %1120 = vmatpush1.xpose.msra.mxu0 0.0
        %1121 = vmatprep.subr.mxu0 0.0
        %1122 = vmatpush1.xpose.msra.mxu0 0.0
        %1123 = vmatprep.subr.mxu0 0.0
        %1124 = vmatpush1.xpose.msra.mxu0 0.0
        %1125 = vmatprep.subr.mxu0 0.0
        %1126 = vmatpush1.xpose.msra.mxu0 0.0
        %1127 = vmatprep.subr.mxu0 0.0
        %1128 = vmatpush1.xpose.msra.mxu0 0.0
        %1129 = vmatprep.subr.mxu0 0.0
        %1130 = vmatpush1.xpose.msra.mxu0 0.0
        %1131 = vmatprep.subr.mxu0 0.0
        %1132 = vmatpush1.xpose.msra.mxu0 0.0
        %1133 = vmatprep.subr.mxu0 0.0
        %1134 = vmatpush1.xpose.msra.mxu0 0.0
        %1135 = vmatprep.subr.mxu0 0.0
        %1136 = vmatpush1.xpose.msra.mxu0 0.0
        %1137 = vmatprep.subr.mxu0 0.0
        %1138 = vmatpush1.xpose.msra.mxu0 0.0
        %1139 = vmatprep.subr.mxu0 0.0
        %1140 = vmatpush1.xpose.msra.mxu0 0.0
        %1141 = vmatprep.subr.mxu0 0.0
        %1142 = vmatpush1.xpose.msra.mxu0 0.0
        %1143 = vmatprep.subr.mxu0 0.0
        %1144 = vmatpush1.xpose.msra.mxu0 0.0
        %1145 = vmatprep.subr.mxu0 0.0
        %1146 = vmatpush1.xpose.msra.mxu0 0.0
        %1147 = vmatprep.subr.mxu0 0.0
        %1148 = vmatpush1.xpose.msra.mxu0 0.0
        %1149 = vmatprep.subr.mxu0 0.0
        %1150 = vmatpush1.xpose.msra.mxu0 0.0
        %1151 = vmatprep.subr.mxu0 0.0
        %1152 = vmatpush1.xpose.msra.mxu0 0.0
        %1153 = vmatprep.subr.mxu0 0.0
        %1154 = vmatpush1.xpose.msra.mxu0 0.0
        %1155 = vmatprep.subr.mxu0 0.0
        %1156 = vmatpush1.xpose.msra.mxu0 0.0
        %1157 = vmatprep.subr.mxu0 0.0
        %1158 = vmatpush1.xpose.msra.mxu0 0.0
        %1159 = vmatprep.subr.mxu0 0.0
        %1160 = vmatpush1.xpose.msra.mxu0 0.0
        %1161 = vmatprep.subr.mxu0 0.0
        %1162 = vmatpush1.xpose.msra.mxu0 0.0
        %1163 = vmatprep.subr.mxu0 0.0
        %1164 = vmatpush1.xpose.msra.mxu0 0.0
        %1165 = vmatprep.subr.mxu0 0.0
        %1166 = vmatpush1.xpose.msra.mxu0 0.0
        %1167 = vmatprep.mubr.f32.mxu0 0.0
        %1168 = vmatmul.mubr.f32.gmra.mrb[0].mxu0 %v1092
        %v1169 = vpop.f32.mrb[0].mxu0
        %v1170 = vadd.f32 0.0, %v1169
        %v1171 = vpop.f32.mrb[0].mxu0
        %1172 = vmatprep.mubr.f32.mxu0 0.0
        %1173 = vmatmul.mubr.f32.gmra.mrb[0].mxu0 %v1095
        %v1174 = vpop.f32.mrb[0].mxu0
        %v1175 = vadd.f32 0.0, %v1174
        %v1176 = vpop.f32.mrb[0].mxu0
        %1177 = vdwg.mxu0
        %v1179 = vsel %vm1090, %v640, 0
        %v1182 = vsel %vm1090, %v672, 0
        %v1185 = vsel %vm1090, %v848, 0
        %v1188 = vsel %vm1090, %v880, 0
        %1190 = vmatprep.subr.mxu0 0.0
        %1191 = vmatpush1.xpose.msra.mxu0 %v1185
        %1192 = vmatprep.subr.mxu0 0.0
        %1193 = vmatpush1.xpose.msra.mxu0 %v1188
        %1194 = vmatprep.subr.mxu0 0.0
        %1195 = vmatpush1.xpose.msra.mxu0 0.0
        %1196 = vmatprep.subr.mxu0 0.0
        %1197 = vmatpush1.xpose.msra.mxu0 0.0
        %1198 = vmatprep.subr.mxu0 0.0
        %1199 = vmatpush1.xpose.msra.mxu0 0.0
        %1200 = vmatprep.subr.mxu0 0.0
        %1201 = vmatpush1.xpose.msra.mxu0 0.0
        %1202 = vmatprep.subr.mxu0 0.0
        %1203 = vmatpush1.xpose.msra.mxu0 0.0
        %1204 = vmatprep.subr.mxu0 0.0
        %1205 = vmatpush1.xpose.msra.mxu0 0.0
        %1206 = vmatprep.subr.mxu0 0.0
        %1207 = vmatpush1.xpose.msra.mxu0 0.0
        %1208 = vmatprep.subr.mxu0 0.0
        %1209 = vmatpush1.xpose.msra.mxu0 0.0
        %1210 = vmatprep.subr.mxu0 0.0
        %1211 = vmatpush1.xpose.msra.mxu0 0.0
        %1212 = vmatprep.subr.mxu0 0.0
        %1213 = vmatpush1.xpose.msra.mxu0 0.0
        %1214 = vmatprep.subr.mxu0 0.0
        %1215 = vmatpush1.xpose.msra.mxu0 0.0
        %1216 = vmatprep.subr.mxu0 0.0
        %1217 = vmatpush1.xpose.msra.mxu0 0.0
        %1218 = vmatprep.subr.mxu0 0.0
        %1219 = vmatpush1.xpose.msra.mxu0 0.0
        %1220 = vmatprep.subr.mxu0 0.0
        %1221 = vmatpush1.xpose.msra.mxu0 0.0
        %1222 = vmatprep.subr.mxu0 0.0
        %1223 = vmatpush1.xpose.msra.mxu0 0.0
        %1224 = vmatprep.subr.mxu0 0.0
        %1225 = vmatpush1.xpose.msra.mxu0 0.0
        %1226 = vmatprep.subr.mxu0 0.0
        %1227 = vmatpush1.xpose.msra.mxu0 0.0
        %1228 = vmatprep.subr.mxu0 0.0
        %1229 = vmatpush1.xpose.msra.mxu0 0.0
        %1230 = vmatprep.subr.mxu0 0.0
        %1231 = vmatpush1.xpose.msra.mxu0 0.0
        %1232 = vmatprep.subr.mxu0 0.0
        %1233 = vmatpush1.xpose.msra.mxu0 0.0
        %1234 = vmatprep.subr.mxu0 0.0
        %1235 = vmatpush1.xpose.msra.mxu0 0.0
        %1236 = vmatprep.subr.mxu0 0.0
        %1237 = vmatpush1.xpose.msra.mxu0 0.0
        %1238 = vmatprep.subr.mxu0 0.0
        %1239 = vmatpush1.xpose.msra.mxu0 0.0
        %1240 = vmatprep.subr.mxu0 0.0
        %1241 = vmatpush1.xpose.msra.mxu0 0.0
        %1242 = vmatprep.subr.mxu0 0.0
        %1243 = vmatpush1.xpose.msra.mxu0 0.0
        %1244 = vmatprep.subr.mxu0 0.0
        %1245 = vmatpush1.xpose.msra.mxu0 0.0
        %1246 = vmatprep.subr.mxu0 0.0
        %1247 = vmatpush1.xpose.msra.mxu0 0.0
        %1248 = vmatprep.subr.mxu0 0.0
        %1249 = vmatpush1.xpose.msra.mxu0 0.0
        %1250 = vmatprep.subr.mxu0 0.0
        %1251 = vmatpush1.xpose.msra.mxu0 0.0
        %1252 = vmatprep.subr.mxu0 0.0
        %1253 = vmatpush1.xpose.msra.mxu0 0.0
        %1254 = vmatprep.mubr.f32.mxu0 0.0
        %1255 = vmatmul.mubr.f32.gmra.mrb[0].mxu0 %v1179
        %v1256 = vpop.f32.mrb[0].mxu0
        %v1257 = vadd.f32 0.0, %v1256
        %v1258 = vpop.f32.mrb[0].mxu0
        %1259 = vmatprep.mubr.f32.mxu0 0.0
        %1260 = vmatmul.mubr.f32.gmra.mrb[0].mxu0 %v1182
        %v1261 = vpop.f32.mrb[0].mxu0
        %v1262 = vadd.f32 0.0, %v1261
        %v1263 = vpop.f32.mrb[0].mxu0
        %1264 = vdwg.mxu0
        %v1266 = vsel %vm1090, %v641, 0
        %v1269 = vsel %vm1090, %v671, 0
        %v1272 = vsel %vm1090, %v849, 0
        %v1275 = vsel %vm1090, %v879, 0
        %1277 = vmatprep.subr.mxu0 0.0
        %1278 = vmatpush1.xpose.msra.mxu0 %v1272
        %1279 = vmatprep.subr.mxu0 0.0
        %1280 = vmatpush1.xpose.msra.mxu0 %v1275
        %1281 = vmatprep.subr.mxu0 0.0
        %1282 = vmatpush1.xpose.msra.mxu0 0.0
        %1283 = vmatprep.subr.mxu0 0.0
        %1284 = vmatpush1.xpose.msra.mxu0 0.0
        %1285 = vmatprep.subr.mxu0 0.0
        %1286 = vmatpush1.xpose.msra.mxu0 0.0
        %1287 = vmatprep.subr.mxu0 0.0
        %1288 = vmatpush1.xpose.msra.mxu0 0.0
        %1289 = vmatprep.subr.mxu0 0.0
        %1290 = vmatpush1.xpose.msra.mxu0 0.0
        %1291 = vmatprep.subr.mxu0 0.0
        %1292 = vmatpush1.xpose.msra.mxu0 0.0
        %1293 = vmatprep.subr.mxu0 0.0
        %1294 = vmatpush1.xpose.msra.mxu0 0.0
        %1295 = vmatprep.subr.mxu0 0.0
        %1296 = vmatpush1.xpose.msra.mxu0 0.0
        %1297 = vmatprep.subr.mxu0 0.0
        %1298 = vmatpush1.xpose.msra.mxu0 0.0
        %1299 = vmatprep.subr.mxu0 0.0
        %1300 = vmatpush1.xpose.msra.mxu0 0.0
        %1301 = vmatprep.subr.mxu0 0.0
        %1302 = vmatpush1.xpose.msra.mxu0 0.0
        %1303 = vmatprep.subr.mxu0 0.0
        %1304 = vmatpush1.xpose.msra.mxu0 0.0
        %1305 = vmatprep.subr.mxu0 0.0
        %1306 = vmatpush1.xpose.msra.mxu0 0.0
        %1307 = vmatprep.subr.mxu0 0.0
        %1308 = vmatpush1.xpose.msra.mxu0 0.0
        %1309 = vmatprep.subr.mxu0 0.0
        %1310 = vmatpush1.xpose.msra.mxu0 0.0
        %1311 = vmatprep.subr.mxu0 0.0
        %1312 = vmatpush1.xpose.msra.mxu0 0.0
        %1313 = vmatprep.subr.mxu0 0.0
        %1314 = vmatpush1.xpose.msra.mxu0 0.0
        %1315 = vmatprep.subr.mxu0 0.0
        %1316 = vmatpush1.xpose.msra.mxu0 0.0
        %1317 = vmatprep.subr.mxu0 0.0
        %1318 = vmatpush1.xpose.msra.mxu0 0.0
        %1319 = vmatprep.subr.mxu0 0.0
        %1320 = vmatpush1.xpose.msra.mxu0 0.0
        %1321 = vmatprep.subr.mxu0 0.0
        %1322 = vmatpush1.xpose.msra.mxu0 0.0
        %1323 = vmatprep.subr.mxu0 0.0
        %1324 = vmatpush1.xpose.msra.mxu0 0.0
        %1325 = vmatprep.subr.mxu0 0.0
        %1326 = vmatpush1.xpose.msra.mxu0 0.0
        %1327 = vmatprep.subr.mxu0 0.0
        %1328 = vmatpush1.xpose.msra.mxu0 0.0
        %1329 = vmatprep.subr.mxu0 0.0
        %1330 = vmatpush1.xpose.msra.mxu0 0.0
        %1331 = vmatprep.subr.mxu0 0.0
        %1332 = vmatpush1.xpose.msra.mxu0 0.0
        %1333 = vmatprep.subr.mxu0 0.0
        %1334 = vmatpush1.xpose.msra.mxu0 0.0
        %1335 = vmatprep.subr.mxu0 0.0
        %1336 = vmatpush1.xpose.msra.mxu0 0.0
        %1337 = vmatprep.subr.mxu0 0.0
        %1338 = vmatpush1.xpose.msra.mxu0 0.0
        %1339 = vmatprep.subr.mxu0 0.0
        %1340 = vmatpush1.xpose.msra.mxu0 0.0
        %1341 = vmatprep.mubr.f32.mxu0 0.0
        %1342 = vmatmul.mubr.f32.gmra.mrb[0].mxu0 %v1266
        %v1343 = vpop.f32.mrb[0].mxu0
        %v1344 = vadd.f32 0.0, %v1343
        %v1345 = vpop.f32.mrb[0].mxu0
        %1346 = vmatprep.mubr.f32.mxu0 0.0
        %1347 = vmatmul.mubr.f32.gmra.mrb[0].mxu0 %v1269
        %v1348 = vpop.f32.mrb[0].mxu0
        %v1349 = vadd.f32 0.0, %v1348
        %v1350 = vpop.f32.mrb[0].mxu0
        %1351 = vdwg.mxu0
        %v1353 = vsel %vm1090, %v642, 0
        %v1356 = vsel %vm1090, %v673, 0
        %v1359 = vsel %vm1090, %v850, 0
        %v1362 = vsel %vm1090, %v881, 0
        %1364 = vmatprep.subr.mxu0 0.0
        %1365 = vmatpush1.xpose.msra.mxu0 %v1359
        %1366 = vmatprep.subr.mxu0 0.0
        %1367 = vmatpush1.xpose.msra.mxu0 %v1362
        %1368 = vmatprep.subr.mxu0 0.0
        %1369 = vmatpush1.xpose.msra.mxu0 0.0
        %1370 = vmatprep.subr.mxu0 0.0
        %1371 = vmatpush1.xpose.msra.mxu0 0.0
        %1372 = vmatprep.subr.mxu0 0.0
        %1373 = vmatpush1.xpose.msra.mxu0 0.0
        %1374 = vmatprep.subr.mxu0 0.0
        %1375 = vmatpush1.xpose.msra.mxu0 0.0
        %1376 = vmatprep.subr.mxu0 0.0
        %1377 = vmatpush1.xpose.msra.mxu0 0.0
        %1378 = vmatprep.subr.mxu0 0.0
        %1379 = vmatpush1.xpose.msra.mxu0 0.0
        %1380 = vmatprep.subr.mxu0 0.0
        %1381 = vmatpush1.xpose.msra.mxu0 0.0
        %1382 = vmatprep.subr.mxu0 0.0
        %1383 = vmatpush1.xpose.msra.mxu0 0.0
        %1384 = vmatprep.subr.mxu0 0.0
        %1385 = vmatpush1.xpose.msra.mxu0 0.0
        %1386 = vmatprep.subr.mxu0 0.0
        %1387 = vmatpush1.xpose.msra.mxu0 0.0
        %1388 = vmatprep.subr.mxu0 0.0
        %1389 = vmatpush1.xpose.msra.mxu0 0.0
        %1390 = vmatprep.subr.mxu0 0.0
        %1391 = vmatpush1.xpose.msra.mxu0 0.0
        %1392 = vmatprep.subr.mxu0 0.0
        %1393 = vmatpush1.xpose.msra.mxu0 0.0
        %1394 = vmatprep.subr.mxu0 0.0
        %1395 = vmatpush1.xpose.msra.mxu0 0.0
        %1396 = vmatprep.subr.mxu0 0.0
        %1397 = vmatpush1.xpose.msra.mxu0 0.0
        %1398 = vmatprep.subr.mxu0 0.0
        %1399 = vmatpush1.xpose.msra.mxu0 0.0
        %1400 = vmatprep.subr.mxu0 0.0
        %1401 = vmatpush1.xpose.msra.mxu0 0.0
        %1402 = vmatprep.subr.mxu0 0.0
        %1403 = vmatpush1.xpose.msra.mxu0 0.0
        %1404 = vmatprep.subr.mxu0 0.0
        %1405 = vmatpush1.xpose.msra.mxu0 0.0
        %1406 = vmatprep.subr.mxu0 0.0
        %1407 = vmatpush1.xpose.msra.mxu0 0.0
        %1408 = vmatprep.subr.mxu0 0.0
        %1409 = vmatpush1.xpose.msra.mxu0 0.0
        %1410 = vmatprep.subr.mxu0 0.0
        %1411 = vmatpush1.xpose.msra.mxu0 0.0
        %1412 = vmatprep.subr.mxu0 0.0
        %1413 = vmatpush1.xpose.msra.mxu0 0.0
        %1414 = vmatprep.subr.mxu0 0.0
        %1415 = vmatpush1.xpose.msra.mxu0 0.0
        %1416 = vmatprep.subr.mxu0 0.0
        %1417 = vmatpush1.xpose.msra.mxu0 0.0
        %1418 = vmatprep.subr.mxu0 0.0
        %1419 = vmatpush1.xpose.msra.mxu0 0.0
        %1420 = vmatprep.subr.mxu0 0.0
        %1421 = vmatpush1.xpose.msra.mxu0 0.0
        %1422 = vmatprep.subr.mxu0 0.0
        %1423 = vmatpush1.xpose.msra.mxu0 0.0
        %1424 = vmatprep.subr.mxu0 0.0
        %1425 = vmatpush1.xpose.msra.mxu0 0.0
        %1426 = vmatprep.subr.mxu0 0.0
        %1427 = vmatpush1.xpose.msra.mxu0 0.0
        %1428 = vmatprep.mubr.f32.mxu0 0.0
        %1429 = vmatmul.mubr.f32.gmra.mrb[0].mxu0 %v1353
        %v1430 = vpop.f32.mrb[0].mxu0
        %v1431 = vadd.f32 0.0, %v1430
        %v1432 = vpop.f32.mrb[0].mxu0
        %1433 = vmatprep.mubr.f32.mxu0 0.0
        %1434 = vmatmul.mubr.f32.gmra.mrb[0].mxu0 %v1356
        %v1435 = vpop.f32.mrb[0].mxu0
        %v1436 = vadd.f32 0.0, %v1435
        %v1437 = vpop.f32.mrb[0].mxu0
        %1438 = vdwg.mxu0
        %vm1439 = vcmask 72704
        %v1440 = vsel %vm1439, %v1170, -inf
        %1441 = vmax.xlane.f32.xlu0 %v1440
        %v1442 = vpop.xlane.xlu0 %1441
        %vm1443 = vcmask 65536
        %v1444 = vsel %vm1443, %v1175, -inf
        %1445 = vmax.xlane.f32.xlu0 %v1444
        %v1446 = vpop.xlane.xlu0 %1445
        %v1447 = vsel %vm1439, %v1257, -inf
        %1448 = vmax.xlane.f32.xlu0 %v1447
        %v1449 = vpop.xlane.xlu0 %1448
        %v1450 = vsel %vm1443, %v1262, -inf
        %1451 = vmax.xlane.f32.xlu0 %v1450
        %v1452 = vpop.xlane.xlu0 %1451
        %v1453 = vsel %vm1439, %v1344, -inf
        %1454 = vmax.xlane.f32.xlu0 %v1453
        %v1455 = vpop.xlane.xlu0 %1454
        %v1456 = vsel %vm1443, %v1349, -inf
        %1457 = vmax.xlane.f32.xlu0 %v1456
        %v1458 = vpop.xlane.xlu0 %1457
        %v1459 = vsel %vm1439, %v1431, -inf
        %1460 = vmax.xlane.f32.xlu0 %v1459
        %v1461 = vpop.xlane.xlu0 %1460
        %v1462 = vsel %vm1443, %v1436, -inf
        %1463 = vmax.xlane.f32.xlu0 %v1462
        %v1464 = vpop.xlane.xlu0 %1463
        %v1465 = vsub.f32 %v1170, %v1442
        %v1466 = vsub.f32 %v1175, %v1446
        %v1467 = vsub.f32 %v1257, %v1449
        %v1468 = vsub.f32 %v1262, %v1452
        %v1469 = vsub.f32 %v1344, %v1455
        %v1470 = vsub.f32 %v1349, %v1458
        %v1471 = vsub.f32 %v1431, %v1461
        %v1472 = vsub.f32 %v1436, %v1464
        %v1473 = vmul.f32 %v1465, 1.442695
        %v1474 = vpow.pop %v1473
        %v1475 = vmul.f32 %v1466, 1.442695
        %v1476 = vpow.pop %v1475
        %v1477 = vmul.f32 %v1467, 1.442695
        %v1478 = vpow.pop %v1477
        %v1479 = vmul.f32 %v1468, 1.442695
        %v1480 = vpow.pop %v1479
        %v1481 = vmul.f32 %v1469, 1.442695
        %v1482 = vpow.pop %v1481
        %v1483 = vmul.f32 %v1470, 1.442695
        %v1484 = vpow.pop %v1483
        %v1485 = vmul.f32 %v1471, 1.442695
        %v1486 = vpow.pop %v1485
        %v1487 = vmul.f32 %v1472, 1.442695
        %v1488 = vpow.pop %v1487
        %v1489 = vsel %vm1439, %v1474, 0.0
        %1490 = vadd.xlane.f32.xlu0 %v1489
        %v1491 = vpop.xlane.xlu0 %1490
        %v1492 = vsel %vm1443, %v1476, 0.0
        %1493 = vadd.xlane.f32.xlu0 %v1492
        %v1494 = vpop.xlane.xlu0 %1493
        %v1495 = vsel %vm1439, %v1478, 0.0
        %1496 = vadd.xlane.f32.xlu0 %v1495
        %v1497 = vpop.xlane.xlu0 %1496
        %v1498 = vsel %vm1443, %v1480, 0.0
        %1499 = vadd.xlane.f32.xlu0 %v1498
        %v1500 = vpop.xlane.xlu0 %1499
        %v1501 = vsel %vm1439, %v1482, 0.0
        %1502 = vadd.xlane.f32.xlu0 %v1501
        %v1503 = vpop.xlane.xlu0 %1502
        %v1504 = vsel %vm1443, %v1484, 0.0
        %1505 = vadd.xlane.f32.xlu0 %v1504
        %v1506 = vpop.xlane.xlu0 %1505
        %v1507 = vsel %vm1439, %v1486, 0.0
        %1508 = vadd.xlane.f32.xlu0 %v1507
        %v1509 = vpop.xlane.xlu0 %1508
        %v1510 = vsel %vm1443, %v1488, 0.0
        %1511 = vadd.xlane.f32.xlu0 %v1510
        %v1512 = vpop.xlane.xlu0 %1511
        %v1513 = vrcp.pop %v1491
        %v1514 = vmul.f32 %v1474, %v1513
        %v1515 = vrcp.pop %v1494
        %v1516 = vmul.f32 %v1476, %v1515
        %v1517 = vrcp.pop %v1497
        %v1518 = vmul.f32 %v1478, %v1517
        %v1519 = vrcp.pop %v1500
        %v1520 = vmul.f32 %v1480, %v1519
        %v1521 = vrcp.pop %v1503
        %v1522 = vmul.f32 %v1482, %v1521
        %v1523 = vrcp.pop %v1506
        %v1524 = vmul.f32 %v1484, %v1523
        %v1525 = vrcp.pop %v1509
        %v1526 = vmul.f32 %v1486, %v1525
        %v1527 = vrcp.pop %v1512
        %v1528 = vmul.f32 %v1488, %v1527
        %1529 = vst.msk [vmem:[%s366] sm:$0xff] %vm1439, %v1514
        %1530 = vst.msk [vmem:[%s366 + $0x8] sm:$0x1] %vm1443, %v1516
        %1531 = vst.msk [vmem:[%s366 + $0x10] sm:$0xff] %vm1439, %v1518
        %1532 = vst.msk [vmem:[%s366 + $0x18] sm:$0x1] %vm1443, %v1520
        %1533 = vst.msk [vmem:[%s366 + $0x20] sm:$0xff] %vm1439, %v1522
        %1534 = vst.msk [vmem:[%s366 + $0x28] sm:$0x1] %vm1443, %v1524
        %1535 = vst.msk [vmem:[%s366 + $0x30] sm:$0xff] %vm1439, %v1526
        %1536 = vst.msk [vmem:[%s366 + $0x38] sm:$0x1] %vm1443, %v1528
        %v1538 = vsel %vm1439, %v1514, 0
        %v1541 = vsel %vm1439, %v1516, 0
        %vm1543 = vcmask 1040384
        %v1545 = vsel %vm1543, %v1080, 0
        %1547 = vmatprep.subr.mxu0 0.0
        %1548 = vmatpush1.msra.mxu0 %v1055
        %1549 = vmatprep.subr.mxu0 0.0
        %1550 = vmatpush1.msra.mxu0 %v1545
        %1551 = vmatprep.subr.mxu0 0.0
        %1552 = vmatpush1.msra.mxu0 0.0
        %1553 = vmatprep.subr.mxu0 0.0
        %1554 = vmatpush1.msra.mxu0 0.0
        %1555 = vmatprep.subr.mxu0 0.0
        %1556 = vmatpush1.msra.mxu0 0.0
        %1557 = vmatprep.subr.mxu0 0.0
        %1558 = vmatpush1.msra.mxu0 0.0
        %1559 = vmatprep.subr.mxu0 0.0
        %1560 = vmatpush1.msra.mxu0 0.0
        %1561 = vmatprep.subr.mxu0 0.0
        %1562 = vmatpush1.msra.mxu0 0.0
        %1563 = vmatprep.subr.mxu0 0.0
        %1564 = vmatpush1.msra.mxu0 0.0
        %1565 = vmatprep.subr.mxu0 0.0
        %1566 = vmatpush1.msra.mxu0 0.0
        %1567 = vmatprep.subr.mxu0 0.0
        %1568 = vmatpush1.msra.mxu0 0.0
        %1569 = vmatprep.subr.mxu0 0.0
        %1570 = vmatpush1.msra.mxu0 0.0
        %1571 = vmatprep.subr.mxu0 0.0
        %1572 = vmatpush1.msra.mxu0 0.0
        %1573 = vmatprep.subr.mxu0 0.0
        %1574 = vmatpush1.msra.mxu0 0.0
        %1575 = vmatprep.subr.mxu0 0.0
        %1576 = vmatpush1.msra.mxu0 0.0
        %1577 = vmatprep.subr.mxu0 0.0
        %1578 = vmatpush1.msra.mxu0 0.0
        %1579 = vmatprep.subr.mxu0 0.0
        %1580 = vmatpush1.msra.mxu0 0.0
        %1581 = vmatprep.subr.mxu0 0.0
        %1582 = vmatpush1.msra.mxu0 0.0
        %1583 = vmatprep.subr.mxu0 0.0
        %1584 = vmatpush1.msra.mxu0 0.0
        %1585 = vmatprep.subr.mxu0 0.0
        %1586 = vmatpush1.msra.mxu0 0.0
        %1587 = vmatprep.subr.mxu0 0.0
        %1588 = vmatpush1.msra.mxu0 0.0
        %1589 = vmatprep.subr.mxu0 0.0
        %1590 = vmatpush1.msra.mxu0 0.0
        %1591 = vmatprep.subr.mxu0 0.0
        %1592 = vmatpush1.msra.mxu0 0.0
        %1593 = vmatprep.subr.mxu0 0.0
        %1594 = vmatpush1.msra.mxu0 0.0
        %1595 = vmatprep.subr.mxu0 0.0
        %1596 = vmatpush1.msra.mxu0 0.0
        %1597 = vmatprep.subr.mxu0 0.0
        %1598 = vmatpush1.msra.mxu0 0.0
        %1599 = vmatprep.subr.mxu0 0.0
        %1600 = vmatpush1.msra.mxu0 0.0
        %1601 = vmatprep.subr.mxu0 0.0
        %1602 = vmatpush1.msra.mxu0 0.0
        %1603 = vmatprep.subr.mxu0 0.0
        %1604 = vmatpush1.msra.mxu0 0.0
        %1605 = vmatprep.subr.mxu0 0.0
        %1606 = vmatpush1.msra.mxu0 0.0
        %1607 = vmatprep.subr.mxu0 0.0
        %1608 = vmatpush1.msra.mxu0 0.0
        %1609 = vmatprep.subr.mxu0 0.0
        %1610 = vmatpush1.msra.mxu0 0.0
        %1611 = vmatprep.mubr.f32.mxu0 0.0
        %1612 = vmatmul.mubr.f32.gmra.mrb[0].mxu0 %v1538
        %v1613 = vpop.f32.mrb[0].mxu0
        %v1614 = vadd.f32 0.0, %v1613
        %v1615 = vpop.f32.mrb[0].mxu0
        %1616 = vmatprep.mubr.f32.mxu0 0.0
        %1617 = vmatmul.mubr.f32.gmra.mrb[0].mxu0 %v1541
        %v1618 = vpop.f32.mrb[0].mxu0
        %v1619 = vadd.f32 0.0, %v1618
        %v1620 = vpop.f32.mrb[0].mxu0
        %1621 = vdwg.mxu0
        %v1623 = vsel %vm1439, %v1518, 0
        %v1626 = vsel %vm1439, %v1520, 0
        %v1629 = vsel %vm1543, %v1088, 0
        %1631 = vmatprep.subr.mxu0 0.0
        %1632 = vmatpush1.msra.mxu0 %v1056
        %1633 = vmatprep.subr.mxu0 0.0
        %1634 = vmatpush1.msra.mxu0 %v1629
        %1635 = vmatprep.subr.mxu0 0.0
        %1636 = vmatpush1.msra.mxu0 0.0
        %1637 = vmatprep.subr.mxu0 0.0
        %1638 = vmatpush1.msra.mxu0 0.0
        %1639 = vmatprep.subr.mxu0 0.0
        %1640 = vmatpush1.msra.mxu0 0.0
        %1641 = vmatprep.subr.mxu0 0.0
        %1642 = vmatpush1.msra.mxu0 0.0
        %1643 = vmatprep.subr.mxu0 0.0
        %1644 = vmatpush1.msra.mxu0 0.0
        %1645 = vmatprep.subr.mxu0 0.0
        %1646 = vmatpush1.msra.mxu0 0.0
        %1647 = vmatprep.subr.mxu0 0.0
        %1648 = vmatpush1.msra.mxu0 0.0
        %1649 = vmatprep.subr.mxu0 0.0
        %1650 = vmatpush1.msra.mxu0 0.0
        %1651 = vmatprep.subr.mxu0 0.0
        %1652 = vmatpush1.msra.mxu0 0.0
        %1653 = vmatprep.subr.mxu0 0.0
        %1654 = vmatpush1.msra.mxu0 0.0
        %1655 = vmatprep.subr.mxu0 0.0
        %1656 = vmatpush1.msra.mxu0 0.0
        %1657 = vmatprep.subr.mxu0 0.0
        %1658 = vmatpush1.msra.mxu0 0.0
        %1659 = vmatprep.subr.mxu0 0.0
        %1660 = vmatpush1.msra.mxu0 0.0
        %1661 = vmatprep.subr.mxu0 0.0
        %1662 = vmatpush1.msra.mxu0 0.0
        %1663 = vmatprep.subr.mxu0 0.0
        %1664 = vmatpush1.msra.mxu0 0.0
        %1665 = vmatprep.subr.mxu0 0.0
        %1666 = vmatpush1.msra.mxu0 0.0
        %1667 = vmatprep.subr.mxu0 0.0
        %1668 = vmatpush1.msra.mxu0 0.0
        %1669 = vmatprep.subr.mxu0 0.0
        %1670 = vmatpush1.msra.mxu0 0.0
        %1671 = vmatprep.subr.mxu0 0.0
        %1672 = vmatpush1.msra.mxu0 0.0
        %1673 = vmatprep.subr.mxu0 0.0
        %1674 = vmatpush1.msra.mxu0 0.0
        %1675 = vmatprep.subr.mxu0 0.0
        %1676 = vmatpush1.msra.mxu0 0.0
        %1677 = vmatprep.subr.mxu0 0.0
        %1678 = vmatpush1.msra.mxu0 0.0
        %1679 = vmatprep.subr.mxu0 0.0
        %1680 = vmatpush1.msra.mxu0 0.0
        %1681 = vmatprep.subr.mxu0 0.0
        %1682 = vmatpush1.msra.mxu0 0.0
        %1683 = vmatprep.subr.mxu0 0.0
        %1684 = vmatpush1.msra.mxu0 0.0
        %1685 = vmatprep.subr.mxu0 0.0
        %1686 = vmatpush1.msra.mxu0 0.0
        %1687 = vmatprep.subr.mxu0 0.0
        %1688 = vmatpush1.msra.mxu0 0.0
        %1689 = vmatprep.subr.mxu0 0.0
        %1690 = vmatpush1.msra.mxu0 0.0
        %1691 = vmatprep.subr.mxu0 0.0
        %1692 = vmatpush1.msra.mxu0 0.0
        %1693 = vmatprep.subr.mxu0 0.0
        %1694 = vmatpush1.msra.mxu0 0.0
        %1695 = vmatprep.mubr.f32.mxu0 0.0
        %1696 = vmatmul.mubr.f32.gmra.mrb[0].mxu0 %v1623
        %v1697 = vpop.f32.mrb[0].mxu0
        %v1698 = vadd.f32 0.0, %v1697
        %v1699 = vpop.f32.mrb[0].mxu0
        %1700 = vmatprep.mubr.f32.mxu0 0.0
        %1701 = vmatmul.mubr.f32.gmra.mrb[0].mxu0 %v1626
        %v1702 = vpop.f32.mrb[0].mxu0
        %v1703 = vadd.f32 0.0, %v1702
        %v1704 = vpop.f32.mrb[0].mxu0
        %1705 = vdwg.mxu0
        %v1707 = vsel %vm1439, %v1522, 0
        %v1710 = vsel %vm1439, %v1524, 0
        %v1713 = vsel %vm1543, %v1087, 0
        %1715 = vmatprep.subr.mxu0 0.0
        %1716 = vmatpush1.msra.mxu0 %v1057
        %1717 = vmatprep.subr.mxu0 0.0
        %1718 = vmatpush1.msra.mxu0 %v1713
        %1719 = vmatprep.subr.mxu0 0.0
        %1720 = vmatpush1.msra.mxu0 0.0
        %1721 = vmatprep.subr.mxu0 0.0
        %1722 = vmatpush1.msra.mxu0 0.0
        %1723 = vmatprep.subr.mxu0 0.0
        %1724 = vmatpush1.msra.mxu0 0.0
        %1725 = vmatprep.subr.mxu0 0.0
        %1726 = vmatpush1.msra.mxu0 0.0
        %1727 = vmatprep.subr.mxu0 0.0
        %1728 = vmatpush1.msra.mxu0 0.0
        %1729 = vmatprep.subr.mxu0 0.0
        %1730 = vmatpush1.msra.mxu0 0.0
        %1731 = vmatprep.subr.mxu0 0.0
        %1732 = vmatpush1.msra.mxu0 0.0
        %1733 = vmatprep.subr.mxu0 0.0
        %1734 = vmatpush1.msra.mxu0 0.0
        %1735 = vmatprep.subr.mxu0 0.0
        %1736 = vmatpush1.msra.mxu0 0.0
        %1737 = vmatprep.subr.mxu0 0.0
        %1738 = vmatpush1.msra.mxu0 0.0
        %1739 = vmatprep.subr.mxu0 0.0
        %1740 = vmatpush1.msra.mxu0 0.0
        %1741 = vmatprep.subr.mxu0 0.0
        %1742 = vmatpush1.msra.mxu0 0.0
        %1743 = vmatprep.subr.mxu0 0.0
        %1744 = vmatpush1.msra.mxu0 0.0
        %1745 = vmatprep.subr.mxu0 0.0
        %1746 = vmatpush1.msra.mxu0 0.0
        %1747 = vmatprep.subr.mxu0 0.0
        %1748 = vmatpush1.msra.mxu0 0.0
        %1749 = vmatprep.subr.mxu0 0.0
        %1750 = vmatpush1.msra.mxu0 0.0
        %1751 = vmatprep.subr.mxu0 0.0
        %1752 = vmatpush1.msra.mxu0 0.0
        %1753 = vmatprep.subr.mxu0 0.0
        %1754 = vmatpush1.msra.mxu0 0.0
        %1755 = vmatprep.subr.mxu0 0.0
        %1756 = vmatpush1.msra.mxu0 0.0
        %1757 = vmatprep.subr.mxu0 0.0
        %1758 = vmatpush1.msra.mxu0 0.0
        %1759 = vmatprep.subr.mxu0 0.0
        %1760 = vmatpush1.msra.mxu0 0.0
        %1761 = vmatprep.subr.mxu0 0.0
        %1762 = vmatpush1.msra.mxu0 0.0
        %1763 = vmatprep.subr.mxu0 0.0
        %1764 = vmatpush1.msra.mxu0 0.0
        %1765 = vmatprep.subr.mxu0 0.0
        %1766 = vmatpush1.msra.mxu0 0.0
        %1767 = vmatprep.subr.mxu0 0.0
        %1768 = vmatpush1.msra.mxu0 0.0
        %1769 = vmatprep.subr.mxu0 0.0
        %1770 = vmatpush1.msra.mxu0 0.0
        %1771 = vmatprep.subr.mxu0 0.0
        %1772 = vmatpush1.msra.mxu0 0.0
        %1773 = vmatprep.subr.mxu0 0.0
        %1774 = vmatpush1.msra.mxu0 0.0
        %1775 = vmatprep.subr.mxu0 0.0
        %1776 = vmatpush1.msra.mxu0 0.0
        %1777 = vmatprep.subr.mxu0 0.0
        %1778 = vmatpush1.msra.mxu0 0.0
        %1779 = vmatprep.mubr.f32.mxu0 0.0
        %1780 = vmatmul.mubr.f32.gmra.mrb[0].mxu0 %v1707
        %v1781 = vpop.f32.mrb[0].mxu0
        %v1782 = vadd.f32 0.0, %v1781
        %v1783 = vpop.f32.mrb[0].mxu0
        %1784 = vmatprep.mubr.f32.mxu0 0.0
        %1785 = vmatmul.mubr.f32.gmra.mrb[0].mxu0 %v1710
        %v1786 = vpop.f32.mrb[0].mxu0
        %v1787 = vadd.f32 0.0, %v1786
        %v1788 = vpop.f32.mrb[0].mxu0
        %1789 = vdwg.mxu0
        %v1791 = vsel %vm1439, %v1526, 0
        %v1794 = vsel %vm1439, %v1528, 0
        %v1797 = vsel %vm1543, %v1089, 0
        %1799 = vmatprep.subr.mxu0 0.0
        %1800 = vmatpush1.msra.mxu0 %v1058
        %1801 = vmatprep.subr.mxu0 0.0
        %1802 = vmatpush1.msra.mxu0 %v1797
        %1803 = vmatprep.subr.mxu0 0.0
        %1804 = vmatpush1.msra.mxu0 0.0
        %1805 = vmatprep.subr.mxu0 0.0
        %1806 = vmatpush1.msra.mxu0 0.0
        %1807 = vmatprep.subr.mxu0 0.0
        %1808 = vmatpush1.msra.mxu0 0.0
        %1809 = vmatprep.subr.mxu0 0.0
        %1810 = vmatpush1.msra.mxu0 0.0
        %1811 = vmatprep.subr.mxu0 0.0
        %1812 = vmatpush1.msra.mxu0 0.0
        %1813 = vmatprep.subr.mxu0 0.0
        %1814 = vmatpush1.msra.mxu0 0.0
        %1815 = vmatprep.subr.mxu0 0.0
        %1816 = vmatpush1.msra.mxu0 0.0
        %1817 = vmatprep.subr.mxu0 0.0
        %1818 = vmatpush1.msra.mxu0 0.0
        %1819 = vmatprep.subr.mxu0 0.0
        %1820 = vmatpush1.msra.mxu0 0.0
        %1821 = vmatprep.subr.mxu0 0.0
        %1822 = vmatpush1.msra.mxu0 0.0
        %1823 = vmatprep.subr.mxu0 0.0
        %1824 = vmatpush1.msra.mxu0 0.0
        %1825 = vmatprep.subr.mxu0 0.0
        %1826 = vmatpush1.msra.mxu0 0.0
        %1827 = vmatprep.subr.mxu0 0.0
        %1828 = vmatpush1.msra.mxu0 0.0
        %1829 = vmatprep.subr.mxu0 0.0
        %1830 = vmatpush1.msra.mxu0 0.0
        %1831 = vmatprep.subr.mxu0 0.0
        %1832 = vmatpush1.msra.mxu0 0.0
        %1833 = vmatprep.subr.mxu0 0.0
        %1834 = vmatpush1.msra.mxu0 0.0
        %1835 = vmatprep.subr.mxu0 0.0
        %1836 = vmatpush1.msra.mxu0 0.0
        %1837 = vmatprep.subr.mxu0 0.0
        %1838 = vmatpush1.msra.mxu0 0.0
        %1839 = vmatprep.subr.mxu0 0.0
        %1840 = vmatpush1.msra.mxu0 0.0
        %1841 = vmatprep.subr.mxu0 0.0
        %1842 = vmatpush1.msra.mxu0 0.0
        %1843 = vmatprep.subr.mxu0 0.0
        %1844 = vmatpush1.msra.mxu0 0.0
        %1845 = vmatprep.subr.mxu0 0.0
        %1846 = vmatpush1.msra.mxu0 0.0
        %1847 = vmatprep.subr.mxu0 0.0
        %1848 = vmatpush1.msra.mxu0 0.0
        %1849 = vmatprep.subr.mxu0 0.0
        %1850 = vmatpush1.msra.mxu0 0.0
        %1851 = vmatprep.subr.mxu0 0.0
        %1852 = vmatpush1.msra.mxu0 0.0
        %1853 = vmatprep.subr.mxu0 0.0
        %1854 = vmatpush1.msra.mxu0 0.0
        %1855 = vmatprep.subr.mxu0 0.0
        %1856 = vmatpush1.msra.mxu0 0.0
        %1857 = vmatprep.subr.mxu0 0.0
        %1858 = vmatpush1.msra.mxu0 0.0
        %1859 = vmatprep.subr.mxu0 0.0
        %1860 = vmatpush1.msra.mxu0 0.0
        %1861 = vmatprep.subr.mxu0 0.0
        %1862 = vmatpush1.msra.mxu0 0.0
        %1863 = vmatprep.mubr.f32.mxu0 0.0
        %1864 = vmatmul.mubr.f32.gmra.mrb[0].mxu0 %v1791
        %v1865 = vpop.f32.mrb[0].mxu0
        %v1866 = vadd.f32 0.0, %v1865
        %v1867 = vpop.f32.mrb[0].mxu0
        %1868 = vmatprep.mubr.f32.mxu0 0.0
        %1869 = vmatmul.mubr.f32.gmra.mrb[0].mxu0 %v1794
        %v1870 = vpop.f32.mrb[0].mxu0
        %v1871 = vadd.f32 0.0, %v1870
        %v1872 = vpop.f32.mrb[0].mxu0
        %1873 = vdwg.mxu0
        %v1874 = vcombine.low %v1614, %v1782
        %v1875 = vcombine.high %v1614, %v1782
        %v1877 = vunpack.c.l.s4 1983009808
        %v1878 = vunpack.c.0.s8 %v1877
        %v1879 = vlaneseq
        %v1880 = vshrl.u32 %v1879, 7
        %v1881 = vsub.s32 %v1878, %v1880
        %v1882 = vrot.slane %v1874, %v1881
        %v1884 = vunpack.c.l.s4 1983009808
        %v1885 = vunpack.c.0.s8 %v1884
        %v1886 = vlaneseq
        %v1887 = vshrl.u32 %v1886, 7
        %v1888 = vsub.s32 %v1885, %v1887
        %v1889 = vrot.slane %v1875, %v1888
        %v1890 = vcombine.low %v1698, %v1866
        %v1891 = vcombine.high %v1698, %v1866
        %v1893 = vunpack.c.l.s4 1983009808
        %v1894 = vunpack.c.0.s8 %v1893
        %v1895 = vlaneseq
        %v1896 = vshrl.u32 %v1895, 7
        %v1897 = vsub.s32 %v1894, %v1896
        %v1898 = vrot.slane %v1890, %v1897
        %v1900 = vunpack.c.l.s4 1983009808
        %v1901 = vunpack.c.0.s8 %v1900
        %v1902 = vlaneseq
        %v1903 = vshrl.u32 %v1902, 7
        %v1904 = vsub.s32 %v1901, %v1903
        %v1905 = vrot.slane %v1891, %v1904
        %v1906 = vcombine.low %v1882, %v1898
        %v1907 = vcombine.high %v1882, %v1898
        %v1909 = vunpack.c.l.s4 1934713408
        %v1910 = vunpack.c.0.s8 %v1909
        %v1911 = vlaneseq
        %v1912 = vshrl.u32 %v1911, 7
        %v1913 = vsub.s32 %v1910, %v1912
        %v1914 = vrot.slane %v1906, %v1913
        %v1916 = vunpack.c.l.s4 1934713408
        %v1917 = vunpack.c.0.s8 %v1916
        %v1918 = vlaneseq
        %v1919 = vshrl.u32 %v1918, 7
        %v1920 = vsub.s32 %v1917, %v1919
        %v1921 = vrot.slane %v1907, %v1920
        %v1922 = vcombine.low %v1889, %v1905
        %v1923 = vcombine.high %v1889, %v1905
        %v1925 = vunpack.c.l.s4 1934713408
        %v1926 = vunpack.c.0.s8 %v1925
        %v1927 = vlaneseq
        %v1928 = vshrl.u32 %v1927, 7
        %v1929 = vsub.s32 %v1926, %v1928
        %v1930 = vrot.slane %v1922, %v1929
        %v1932 = vunpack.c.l.s4 1934713408
        %v1933 = vunpack.c.0.s8 %v1932
        %v1934 = vlaneseq
        %v1935 = vshrl.u32 %v1934, 7
        %v1936 = vsub.s32 %v1933, %v1935
        %v1937 = vrot.slane %v1923, %v1936
        %v1938 = vcombine.high %v1914, 0.0
        %v1939 = vcombine.high %v1921, 0.0
        %v1940 = vcombine.high %v1930, 0.0
        %v1941 = vcombine.high %v1937, 0.0
        %v1942 = vcombine.low %v1619, %v1787
        %v1944 = vunpack.c.l.s4 1983009808
        %v1945 = vunpack.c.0.s8 %v1944
        %v1946 = vlaneseq
        %v1947 = vshrl.u32 %v1946, 7
        %v1948 = vsub.s32 %v1945, %v1947
        %v1949 = vrot.slane %v1942, %v1948
        %v1950 = vcombine.low %v1703, %v1871
        %v1952 = vunpack.c.l.s4 1983009808
        %v1953 = vunpack.c.0.s8 %v1952
        %v1954 = vlaneseq
        %v1955 = vshrl.u32 %v1954, 7
        %v1956 = vsub.s32 %v1953, %v1955
        %v1957 = vrot.slane %v1950, %v1956
        %v1958 = vcombine.low %v1949, %v1957
        %v1959 = vcombine.low %v1914, %v1921
        %v1961 = vunpack.c.l.s4 1983009808
        %v1962 = vunpack.c.0.s8 %v1961
        %v1963 = vlaneseq
        %v1964 = vshrl.u32 %v1963, 7
        %v1965 = vsub.s32 %v1962, %v1964
        %v1966 = vrot.slane %v1959, %v1965
        %v1967 = vcombine.low %v1938, %v1939
        %v1969 = vunpack.c.l.s4 1983009808
        %v1970 = vunpack.c.0.s8 %v1969
        %v1971 = vlaneseq
        %v1972 = vshrl.u32 %v1971, 7
        %v1973 = vsub.s32 %v1970, %v1972
        %v1974 = vrot.slane %v1967, %v1973
        %v1975 = vcombine.low %v1930, %v1937
        %v1977 = vunpack.c.l.s4 1983009808
        %v1978 = vunpack.c.0.s8 %v1977
        %v1979 = vlaneseq
        %v1980 = vshrl.u32 %v1979, 7
        %v1981 = vsub.s32 %v1978, %v1980
        %v1982 = vrot.slane %v1975, %v1981
        %v1983 = vcombine.low %v1940, %v1941
        %v1985 = vunpack.c.l.s4 1983009808
        %v1986 = vunpack.c.0.s8 %v1985
        %v1987 = vlaneseq
        %v1988 = vshrl.u32 %v1987, 7
        %v1989 = vsub.s32 %v1986, %v1988
        %v1990 = vrot.slane %v1983, %v1989
        %v1991 = vcombine.low %v1966, %v1974
        %v1992 = vcombine.high %v1966, %v1974
        %v1994 = vunpack.c.l.s4 1934713408
        %v1995 = vunpack.c.0.s8 %v1994
        %v1996 = vlaneseq
        %v1997 = vshrl.u32 %v1996, 7
        %v1998 = vsub.s32 %v1995, %v1997
        %v1999 = vrot.slane %v1991, %v1998
        %v2001 = vunpack.c.l.s4 1934713408
        %v2002 = vunpack.c.0.s8 %v2001
        %v2003 = vlaneseq
        %v2004 = vshrl.u32 %v2003, 7
        %v2005 = vsub.s32 %v2002, %v2004
        %v2006 = vrot.slane %v1992, %v2005
        %v2007 = vcombine.low %v1982, %v1990
        %v2008 = vcombine.high %v1982, %v1990
        %v2010 = vunpack.c.l.s4 1934713408
        %v2011 = vunpack.c.0.s8 %v2010
        %v2012 = vlaneseq
        %v2013 = vshrl.u32 %v2012, 7
        %v2014 = vsub.s32 %v2011, %v2013
        %v2015 = vrot.slane %v2007, %v2014
        %v2017 = vunpack.c.l.s4 1934713408
        %v2018 = vunpack.c.0.s8 %v2017
        %v2019 = vlaneseq
        %v2020 = vshrl.u32 %v2019, 7
        %v2021 = vsub.s32 %v2018, %v2020
        %v2022 = vrot.slane %v2008, %v2021
        %v2023 = vcombine.low %v1999, %v2015
        %v2024 = vcombine.high %v1999, %v2015
        %v2025 = vcombine.low %v2006, %v2022
        %v2026 = vcombine.high %v2006, %v2022
        %v2028 = vunpack.c.l.s4 1934713408
        %v2029 = vunpack.c.0.s8 %v2028
        %v2030 = vlaneseq
        %v2031 = vshrl.u32 %v2030, 7
        %v2032 = vsub.s32 %v2029, %v2031
        %v2033 = vrot.slane %v1958, %v2032
        %v2035 = vunpack.c.l.s4 1983009808
        %v2036 = vunpack.c.0.s8 %v2035
        %v2037 = vlaneseq
        %v2038 = vshrl.u32 %v2037, 7
        %v2039 = vsub.s32 %v2036, %v2038
        %v2040 = vrot.slane %v2033, %v2039
        %v2041 = vcombine.high %v2040, 0.0
        %v2043 = vunpack.c.l.s4 1934713408
        %v2044 = vunpack.c.0.s8 %v2043
        %v2045 = vlaneseq
        %v2046 = vshrl.u32 %v2045, 7
        %v2047 = vsub.s32 %v2044, %v2046
        %v2048 = vrot.slane %v2040, %v2047
        %v2050 = vunpack.c.l.s4 1934713408
        %v2051 = vunpack.c.0.s8 %v2050
        %v2052 = vlaneseq
        %v2053 = vshrl.u32 %v2052, 7
        %v2054 = vsub.s32 %v2051, %v2053
        %v2055 = vrot.slane %v2041, %v2054
        %v2056 = vcombine.high %v2048, 0.0
        %v2057 = vcombine.high %v2055, 0.0
        %2060 = vrot.lane.b32.xlu0 %v2024, 8
        %v2061 = vpop.permute.xlu0 %2060
        %2062 = vrot.lane.b32.xlu0 %v2056, 8
        %v2063 = vpop.permute.xlu0 %2062
        %2068 = vrot.lane.b32.xlu0 %v2025, 16
        %v2069 = vpop.permute.xlu0 %2068
        %2070 = vrot.lane.b32.xlu0 %v2055, 16
        %v2071 = vpop.permute.xlu0 %2070
        %2076 = vrot.lane.b32.xlu0 %v2026, 24
        %v2077 = vpop.permute.xlu0 %2076
        %2078 = vrot.lane.b32.xlu0 %v2057, 24
        %v2079 = vpop.permute.xlu0 %2078
        %v2082 = vsel %vm1090, %v2023, %v2061
        %v2083 = vsel %vm1090, %v2048, %v2063
        %vm2084 = vcmask 130048
        %v2085 = vsel %vm2084, %v2082, %v2069
        %v2086 = vsel %vm2084, %v2083, %v2071
        %vm2087 = vcmask 195584
        %v2088 = vsel %vm2087, %v2085, %v2077
        %v2089 = vsel %vm2087, %v2086, %v2079
        %v2090 = vld [vmem:[%s286] sm:$0xff]
        %v2091 = vld [vmem:[%s286 + $0x8] sm:$0xff]
        %v2092 = vld [vmem:[%s286 + $0x10] sm:$0xff]
        %v2093 = vld [vmem:[%s286 + $0x18] sm:$0xff]
        %v2094 = vlaneseq
        %v2095 = vshrl.u32 %v2094, 7
        %v2096 = vsub.s32 1, %v2095
        %v2097 = vrot.slane %v379, %v2096
        %v2099 = vsel %vm388, %v2088, 0
        %v2102 = vsel %vm388, %v2089, 0
        %2104 = vmatprep.subr.mxu0 0.0
        %2105 = vmatpush1.msra.mxu0 %v2090
        %2106 = vmatprep.subr.mxu0 0.0
        %2107 = vmatpush1.msra.mxu0 %v2091
        %2108 = vmatprep.subr.mxu0 0.0
        %2109 = vmatpush1.msra.mxu0 %v2092
        %2110 = vmatprep.subr.mxu0 0.0
        %2111 = vmatpush1.msra.mxu0 %v2093
        %2112 = vmatprep.subr.mxu0 0.0
        %2113 = vmatpush1.msra.mxu0 0.0
        %2114 = vmatprep.subr.mxu0 0.0
        %2115 = vmatpush1.msra.mxu0 0.0
        %2116 = vmatprep.subr.mxu0 0.0
        %2117 = vmatpush1.msra.mxu0 0.0
        %2118 = vmatprep.subr.mxu0 0.0
        %2119 = vmatpush1.msra.mxu0 0.0
        %2120 = vmatprep.subr.mxu0 0.0
        %2121 = vmatpush1.msra.mxu0 0.0
        %2122 = vmatprep.subr.mxu0 0.0
        %2123 = vmatpush1.msra.mxu0 0.0
        %2124 = vmatprep.subr.mxu0 0.0
        %2125 = vmatpush1.msra.mxu0 0.0
        %2126 = vmatprep.subr.mxu0 0.0
        %2127 = vmatpush1.msra.mxu0 0.0
        %2128 = vmatprep.subr.mxu0 0.0
        %2129 = vmatpush1.msra.mxu0 0.0
        %2130 = vmatprep.subr.mxu0 0.0
        %2131 = vmatpush1.msra.mxu0 0.0
        %2132 = vmatprep.subr.mxu0 0.0
        %2133 = vmatpush1.msra.mxu0 0.0
        %2134 = vmatprep.subr.mxu0 0.0
        %2135 = vmatpush1.msra.mxu0 0.0
        %2136 = vmatprep.subr.mxu0 0.0
        %2137 = vmatpush1.msra.mxu0 0.0
        %2138 = vmatprep.subr.mxu0 0.0
        %2139 = vmatpush1.msra.mxu0 0.0
        %2140 = vmatprep.subr.mxu0 0.0
        %2141 = vmatpush1.msra.mxu0 0.0
        %2142 = vmatprep.subr.mxu0 0.0
        %2143 = vmatpush1.msra.mxu0 0.0
        %2144 = vmatprep.subr.mxu0 0.0
        %2145 = vmatpush1.msra.mxu0 0.0
        %2146 = vmatprep.subr.mxu0 0.0
        %2147 = vmatpush1.msra.mxu0 0.0
        %2148 = vmatprep.subr.mxu0 0.0
        %2149 = vmatpush1.msra.mxu0 0.0
        %2150 = vmatprep.subr.mxu0 0.0
        %2151 = vmatpush1.msra.mxu0 0.0
        %2152 = vmatprep.subr.mxu0 0.0
        %2153 = vmatpush1.msra.mxu0 0.0
        %2154 = vmatprep.subr.mxu0 0.0
        %2155 = vmatpush1.msra.mxu0 0.0
        %2156 = vmatprep.subr.mxu0 0.0
        %2157 = vmatpush1.msra.mxu0 0.0
        %2158 = vmatprep.subr.mxu0 0.0
        %2159 = vmatpush1.msra.mxu0 0.0
        %2160 = vmatprep.subr.mxu0 0.0
        %2161 = vmatpush1.msra.mxu0 0.0
        %2162 = vmatprep.subr.mxu0 0.0
        %2163 = vmatpush1.msra.mxu0 0.0
        %2164 = vmatprep.subr.mxu0 0.0
        %2165 = vmatpush1.msra.mxu0 0.0
        %2166 = vmatprep.subr.mxu0 0.0
        %2167 = vmatpush1.msra.mxu0 0.0
        %2168 = vmatprep.mubr.f32.mxu0 0.0
        %2169 = vmatmul.mubr.f32.gmra.mrb[0].mxu0 %v2099
        %v2170 = vpop.f32.mrb[0].mxu0
        %v2171 = vadd.f32 %v2097, %v2170
        %v2172 = vpop.f32.mrb[0].mxu0
        %2173 = vmatprep.mubr.f32.mxu0 0.0
        %2174 = vmatmul.mubr.f32.gmra.mrb[0].mxu0 %v2102
        %v2175 = vpop.f32.mrb[0].mxu0
        %v2176 = vadd.f32 %v2097, %v2175
        %v2177 = vpop.f32.mrb[0].mxu0
        %2178 = vdwg.mxu0
        %v2179 = vadd.f32 %v377, %v2171
        %v2180 = vadd.f32 %v378, %v2176
        %v2181 = vsel %vm388, %v2179, 0.0
        %2182 = vadd.xlane.f32.xlu0 %v2181
        %v2183 = vpop.xlane.xlu0 %2182
        %vm2184 = vcmask 253952
        %v2185 = vsel %vm2184, %v2180, 0.0
        %2186 = vadd.xlane.f32.xlu0 %v2185
        %v2187 = vpop.xlane.xlu0 %2186
        %v2188 = vrcp.pop 32.0
        %v2189 = vmul.f32 %v2183, %v2188
        %v2190 = vmul.f32 %v2187, %v2188
        %v2191 = vsub.f32 %v2179, %v2189
        %v2192 = vsub.f32 %v2180, %v2190
        %v2193 = vmul.f32 %v2191, %v2191
        %v2194 = vmul.f32 %v2192, %v2192
        %v2195 = vsel %vm388, %v2193, 0.0
        %2196 = vadd.xlane.f32.xlu0 %v2195
        %v2197 = vpop.xlane.xlu0 %2196
        %v2198 = vsel %vm2184, %v2194, 0.0
        %2199 = vadd.xlane.f32.xlu0 %v2198
        %v2200 = vpop.xlane.xlu0 %2199
        %v2201 = vmul.f32 %v2197, %v2188
        %v2202 = vmul.f32 %v2200, %v2188
        %v2203 = vadd.f32 %v2201, 1e-05
        %v2204 = vadd.f32 %v2202, 1e-05
        %v2205 = vrsqrt.pop %v2203
        %v2206 = vrsqrt.pop %v2204
        %v2207 = vmul.f32 %v2191, %v2205
        %v2208 = vmul.f32 %v2192, %v2206
        %v2209 = vlaneseq
        %v2210 = vshrl.u32 %v2209, 7
        %v2211 = vsub.s32 2, %v2210
        %v2212 = vrot.slane %v379, %v2211
        %v2213 = vmul.f32 %v2207, %v2212
        %v2214 = vmul.f32 %v2208, %v2212
        %v2215 = vlaneseq
        %v2216 = vshrl.u32 %v2215, 7
        %v2217 = vsub.s32 3, %v2216
        %v2218 = vrot.slane %v379, %v2217
        %v2219 = vadd.f32 %v2213, %v2218
        %v2220 = vadd.f32 %v2214, %v2218
        %2221 = vst.msk [vmem:[#allocation2] sm:$0xff] %vm388, %v2219
        %2222 = vst.msk [vmem:[#allocation2 + $0x8] sm:$0x1] %vm2184, %v2220
        %2223 = vst.msk [vmem:[%s357] sm:$0xff] %vm388, %v2219
        %2224 = vst.msk [vmem:[%s357 + $0x8] sm:$0x1] %vm2184, %v2220
        %p2225 = scmp.lt.s32.totalorder %s28, 1
        %s2226 = scalar_select %p2225, %s28, 1
        %p2227 = scmp.lt.s32.totalorder %s27, 1
        %s2228 = scalar_select %p2227, %s27, 1
        %s2229 = smul.addr %s2228, 2
        %s2230 = smul.addr %s2226, 4
        %s2231 = sadd.s32 %s2229, %s2230
        %s2232 = smul.addr %s2231, 8
        %s2233 = scalar_lea.vmem %s4, %s2232
        %p2234 = scmp.lt.s32.totalorder %s28, 1
        %s2235 = scalar_select %p2234, %s28, 1
        %p2236 = scmp.lt.s32.totalorder %s27, 1
        %s2237 = scalar_select %p2236, %s27, 1
        %s2238 = smul.addr %s2237, 8
        %s2239 = smul.addr %s2235, 16
        %s2240 = sadd.s32 %s2238, %s2239
        %s2241 = smul.addr %s2240, 8
        %s2242 = scalar_lea.vmem %s5, %s2241
        // Predicated region
        $region49: #{tpu_custom_call.1} parent=35 // pred_check
          %p2243 = pneg %p159
        $region50: #{tpu_custom_call.1} parent=35 // pred_check_branch
          %2245 = sbr.rel (%p2243) target = $region52
        $region51: #{tpu_custom_call.1} parent=35 // pred_region
          _
        $region52: #{tpu_custom_call.1} parent=35 // pred_fallthru
          _
        // Predicated region
        $region53: #{tpu_custom_call.1} parent=35 // pred_check
          %p2246 = pneg %p187
        $region54: #{tpu_custom_call.1} parent=35 // pred_check_branch
          %2248 = sbr.rel (%p2246) target = $region56
        $region55: #{tpu_custom_call.1} parent=35 // pred_region
          _
        $region56: #{tpu_custom_call.1} parent=35 // pred_fallthru
          _
      $region36: #{tpu_custom_call.1} parent=5 // pred_fallthru
        _
      %p2249 = scmp.le.s32.totalorder 2, %s18
      // Predicated region
      $region57: #{tpu_custom_call.1} parent=5 // pred_check
        %p2250 = pneg %p2249
      $region58: #{tpu_custom_call.1} parent=5 // pred_check_branch
        %2252 = sbr.rel (%p2250) target = $region60
      $region59: #{tpu_custom_call.1} parent=5 // pred_region
        %s2253 = ssub.s32 %s18, 2
        // Predicated region
        $region61: #{tpu_custom_call.1} parent=59 // pred_check
          %p2254 = pneg %p165
        $region62: #{tpu_custom_call.1} parent=59 // pred_check_branch
          %2256 = sbr.rel (%p2254) target = $region64
        $region63: #{tpu_custom_call.1} parent=59 // pred_region
          %p2257 = scmp.lt.s32.totalorder %s30, 1
          %s2258 = scalar_select %p2257, %s30, 1
          %p2259 = scmp.lt.s32.totalorder %s29, 1
          %s2260 = scalar_select %p2259, %s29, 1
          %s2261 = smul.addr %s2260, 2
          %s2262 = smul.addr %s2258, 4
          %s2263 = sadd.s32 %s2261, %s2262
          %s2264 = smul.addr %s2263, 8
          %s2265 = scalar_lea.vmem %s4, %s2264
        $region64: #{tpu_custom_call.1} parent=59 // pred_fallthru
          _
        // Predicated region
        $region65: #{tpu_custom_call.1} parent=59 // pred_check
          %p2266 = pneg %p193
        $region66: #{tpu_custom_call.1} parent=59 // pred_check_branch
          %2268 = sbr.rel (%p2266) target = $region68
        $region67: #{tpu_custom_call.1} parent=59 // pred_region
          %p2269 = scmp.lt.s32.totalorder %s30, 1
          %s2270 = scalar_select %p2269, %s30, 1
          %p2271 = scmp.lt.s32.totalorder %s29, 1
          %s2272 = scalar_select %p2271, %s29, 1
          %s2273 = smul.addr %s2272, 8
          %s2274 = smul.addr %s2270, 16
          %s2275 = sadd.s32 %s2273, %s2274
          %s2276 = smul.addr %s2275, 8
          %s2277 = scalar_lea.vmem %s5, %s2276
        $region68: #{tpu_custom_call.1} parent=59 // pred_fallthru
          _
      $region60: #{tpu_custom_call.1} parent=5 // pred_fallthru
        _
    $region6: #{tpu_custom_call.1} parent=1 // loop_footer
      %s22 = sadd.s32 1, %s18
    $region7: #{tpu_custom_call.1} parent=1 // loop_footer_branch
      %17 = sbr.rel target = $region3
    $region8: #{tpu_custom_call.1} parent=1 // loop_exit
      _
    %2278 = vsyncpa [#allocation4], 1
    %s2279 = scalar_lea.sflag [#allocation4], 1
    %2280 = vsyncpa %s2279, 1
    %2281 = vsyncpa [#allocation6], 1
    %s2282 = scalar_lea.sflag [#allocation6], 1
    %2283 = vsyncpa %s2282, 1

</llo_original>
